<compile_context>
chip_gen: v5e
topology: v5e:2x2
jax: 0.10.0
libtpu: 0.0.40
codegen_flags: <defaults>
</compile_context>

<pallas_src>
import functools

import jax
import jax.numpy as jnp
from jax.experimental import pallas as pl
from jax.experimental.pallas import tpu as pltpu

IN_F = 804     # input features (contraction dim, left unpadded)
HID = 405      # hidden features
OUT_F = 5      # output features

HP = 512       # 405 padded to 4*128  (hidden lane dim / second contraction)
NP = 128       # 5   padded to 1*128  (output lane dim, lane-dense stores)


def _round_up(v, m):
    return (v + m - 1) // m * m


def _pick_tile(batch, tm_max):
    """Row-tile size: multiple of 16 (bf16 sublane packing), capped at tm_max,
    and shrunk so the grid has >=2 steps whenever the batch allows it (v7x has
    2 TensorCores; a 1-step grid would leave one idle)."""
    tm_max = max(16, _round_up(tm_max, 16))
    half = _round_up(max((batch + 1) // 2, 1), 16)
    return min(tm_max, half)


def mlp_kernel(x_ref, w1_ref, b1_ref, w2_ref, b2_ref, o_ref):
    # x: [TM, 804] bf16 (or f32, cast in-register), w1: [804, 512] bf16,
    # b1: [1, 512] f32, w2: [512, 128] bf16, b2: [1, 128] f32, out: [TM, 128] f32.
    x = x_ref[...]
    if x.dtype != jnp.bfloat16:
        x = x.astype(jnp.bfloat16)
    h = jnp.dot(x, w1_ref[...], preferred_element_type=jnp.float32) + b1_ref[...]
    h = jnp.tanh(h)  # bias-add / tanh kept in f32 (v5e has no bf16 VPU/EUP)
    out = jnp.dot(h.astype(jnp.bfloat16), w2_ref[...],
                  preferred_element_type=jnp.float32) + b2_ref[...]
    o_ref[...] = out.astype(o_ref.dtype)


def prepare_params(w1, b1, w2, b2):
    """Zero-pad params to lane-aligned shapes and cast weights to bf16 (done once).

    Inputs use [in_features, out_features] layout (transposed from PyTorch's [out, in]).
    Padded hidden/output lanes are zero so they contribute nothing to the real outputs.
    """
    w1p = jnp.zeros((IN_F, HP), jnp.bfloat16).at[:, :HID].set(w1.astype(jnp.bfloat16))
    b1p = jnp.zeros((1, HP), jnp.float32).at[0, :HID].set(b1.astype(jnp.float32))
    w2p = jnp.zeros((HP, NP), jnp.bfloat16).at[:HID, :OUT_F].set(w2.astype(jnp.bfloat16))
    b2p = jnp.zeros((1, NP), jnp.float32).at[0, :OUT_F].set(b2.astype(jnp.float32))
    return w1p, b1p, w2p, b2p


@functools.partial(jax.jit, static_argnames=("tm",))
def antibiotic_predictor_forward(x, w1p, b1p, w2p, b2p, *, tm=512):
    """x: [B, 804] (bf16 preferred, f32 accepted); params from prepare_params().
    Returns [B, 5] float32. No host-side copies / padding of x."""
    B = x.shape[0]
    tm_eff = _pick_tile(B, tm)
    grid = (pl.cdiv(B, tm_eff),)   # partial last block; padded rows never written back

    flops = 2 * B * (IN_F * HP + HP * NP)
    bytes_accessed = (x.size * x.dtype.itemsize
                      + w1p.size * 2 + w2p.size * 2
                      + b1p.size * 4 + b2p.size * 4
                      + B * NP * 4)

    out = pl.pallas_call(
        mlp_kernel,
        out_shape=jax.ShapeDtypeStruct((B, NP), jnp.float32),
        grid=grid,
        in_specs=[
            pl.BlockSpec((tm_eff, IN_F), lambda i: (i, 0)),  # x: marches over row tiles
            pl.BlockSpec((IN_F, HP), lambda i: (0, 0)),      # w1: resident across grid
            pl.BlockSpec((1, HP), lambda i: (0, 0)),         # b1: resident
            pl.BlockSpec((HP, NP), lambda i: (0, 0)),        # w2: resident
            pl.BlockSpec((1, NP), lambda i: (0, 0)),         # b2: resident
        ],
        out_specs=pl.BlockSpec((tm_eff, NP), lambda i: (i, 0)),
        compiler_params=pltpu.CompilerParams(
            dimension_semantics=("parallel",),        # shard batch across v7x's 2 TCs
            vmem_limit_bytes=32 * 1024 * 1024),       # headroom for tm up to 1024
        cost_estimate=pl.CostEstimate(
            flops=flops, transcendentals=B * HP, bytes_accessed=bytes_accessed),
    )(x, w1p, b1p, w2p, b2p)

    return out[:, :OUT_F]


def init_params(key):
    """nn.Linear default init U(-1/sqrt(fan_in), 1/sqrt(fan_in)); weights stored [in, out]."""
    k1, k2, k3, k4 = jax.random.split(key, 4)
    bound1 = 1.0 / jnp.sqrt(jnp.float32(IN_F))
    bound2 = 1.0 / jnp.sqrt(jnp.float32(HID))
    w1 = jax.random.uniform(k1, (IN_F, HID), jnp.float32, -bound1, bound1)
    b1 = jax.random.uniform(k2, (HID,), jnp.float32, -bound1, bound1)
    w2 = jax.random.uniform(k3, (HID, OUT_F), jnp.float32, -bound2, bound2)
    b2 = jax.random.uniform(k4, (OUT_F,), jnp.float32, -bound2, bound2)
    return w1, b1, w2, b2


if __name__ == "__main__":
    key = jax.random.PRNGKey(0)
    k_in, k_params = jax.random.split(key)

    batch = 8
    x = jax.random.normal(k_in, (batch, IN_F), jnp.float32)
    w1, b1, w2, b2 = init_params(k_params)
    params = prepare_params(w1, b1, w2, b2)

    # Feed x as bf16 ("cast at the producer"): halves the dominant HBM stream
    # and removes the per-tile f32->bf16 VPU cast inside the kernel.
    out = antibiotic_predictor_forward(x.astype(jnp.bfloat16), *params)
    out = jax.block_until_ready(out)

    # Pure-JAX f32 reference (same semantics as the PyTorch module in eval mode).
    # Tolerance relaxed because matmul operands are bf16 (f32 accumulation);
    # observed error is ~1e-3 on these K~800 contractions.
    ref = jnp.tanh(x @ w1 + b1) @ w2 + b2
    assert out.shape == (batch, OUT_F)
    assert jnp.allclose(out, ref, atol=2e-2, rtol=2e-2), \
        float(jnp.max(jnp.abs(out - ref)))

    # Multi-tile grid path: batch not a multiple of TM, partial last block.
    batch2 = 260
    x2 = jax.random.normal(jax.random.PRNGKey(1), (batch2, IN_F), jnp.float32)
    out2 = jax.block_until_ready(
        antibiotic_predictor_forward(x2.astype(jnp.bfloat16), *params))
    ref2 = jnp.tanh(x2 @ w1 + b1) @ w2 + b2
    assert out2.shape == (batch2, OUT_F)
    assert jnp.allclose(out2, ref2, atol=2e-2, rtol=2e-2), \
        float(jnp.max(jnp.abs(out2 - ref2)))

    # f32 input path (kernel casts in-register; still no extra HBM pass over x).
    out3 = jax.block_until_ready(antibiotic_predictor_forward(x2, *params))
    assert jnp.allclose(out3, ref2, atol=2e-2, rtol=2e-2), \
        float(jnp.max(jnp.abs(out3 - ref2)))

    print("KERNEL_OK")
</pallas_src>

<mosaic_0001>
module attributes {stable_mosaic.version = 11 : i64} {
  func.func @mlp_kernel(%arg0: i32, %arg1: memref<16x804xbf16, #tpu.memory_space<vmem>>, %arg2: memref<804x512xbf16, #tpu.memory_space<vmem>>, %arg3: memref<1x512xf32, #tpu.memory_space<vmem>>, %arg4: memref<512x128xbf16, #tpu.memory_space<vmem>>, %arg5: memref<1x128xf32, #tpu.memory_space<vmem>>, %arg6: memref<16x128xf32, #tpu.memory_space<vmem>>) attributes {dimension_semantics = [#tpu.dimension_semantics<parallel>], iteration_bounds = array<i64: 1>, scalar_prefetch = 0 : i64, scratch_operands = 0 : i64, tpu.core_type = #tpu.core_type<tc>, window_params = [{transform_indices = @transform_0, window_bounds = array<i64: 16, 804>}, {pipeline_mode = #tpu.pipeline_mode<synchronous>, transform_indices = @transform_1, window_bounds = array<i64: 804, 512>}, {pipeline_mode = #tpu.pipeline_mode<synchronous>, transform_indices = @transform_2, window_bounds = array<i64: 1, 512>}, {pipeline_mode = #tpu.pipeline_mode<synchronous>, transform_indices = @transform_3, window_bounds = array<i64: 512, 128>}, {pipeline_mode = #tpu.pipeline_mode<synchronous>, transform_indices = @transform_4, window_bounds = array<i64: 1, 128>}, {transform_indices = @transform_5, window_bounds = array<i64: 16, 128>}]} {
    %c0 = arith.constant 0 : index
    %c0_0 = arith.constant 0 : index
    %0 = vector.load %arg1[%c0, %c0_0] : memref<16x804xbf16, #tpu.memory_space<vmem>>, vector<16x804xbf16>
    %c0_1 = arith.constant 0 : index
    %c0_2 = arith.constant 0 : index
    %1 = vector.load %arg2[%c0_1, %c0_2] : memref<804x512xbf16, #tpu.memory_space<vmem>>, vector<804x512xbf16>
    %cst = arith.constant dense<0.000000e+00> : vector<16x512xf32>
    %2 = tpu.matmul %0, %1, %cst {dimension_numbers = #tpu.dot_dimension_numbers<[1], [0], [0], [1], [0, 0, 1, 1], [], []>} : vector<16x804xbf16>, vector<804x512xbf16>, vector<16x512xf32> -> vector<16x512xf32>
    %c0_3 = arith.constant 0 : index
    %c0_4 = arith.constant 0 : index
    %3 = vector.load %arg3[%c0_3, %c0_4] : memref<1x512xf32, #tpu.memory_space<vmem>>, vector<1x512xf32>
    %4 = vector.broadcast %3 : vector<1x512xf32> to vector<16x512xf32>
    %5 = arith.addf %2, %4 : vector<16x512xf32>
    %6 = math.tanh %5 : vector<16x512xf32>
    %7 = arith.truncf %6 : vector<16x512xf32> to vector<16x512xbf16>
    %c0_5 = arith.constant 0 : index
    %c0_6 = arith.constant 0 : index
    %8 = vector.load %arg4[%c0_5, %c0_6] : memref<512x128xbf16, #tpu.memory_space<vmem>>, vector<512x128xbf16>
    %cst_7 = arith.constant dense<0.000000e+00> : vector<16x128xf32>
    %9 = tpu.matmul %7, %8, %cst_7 {dimension_numbers = #tpu.dot_dimension_numbers<[1], [0], [0], [1], [0, 0, 1, 1], [], []>} : vector<16x512xbf16>, vector<512x128xbf16>, vector<16x128xf32> -> vector<16x128xf32>
    %c0_8 = arith.constant 0 : index
    %c0_9 = arith.constant 0 : index
    %10 = vector.load %arg5[%c0_8, %c0_9] : memref<1x128xf32, #tpu.memory_space<vmem>>, vector<1x128xf32>
    %11 = vector.broadcast %10 : vector<1x128xf32> to vector<16x128xf32>
    %12 = arith.addf %9, %11 : vector<16x128xf32>
    %c0_10 = arith.constant 0 : index
    %c0_11 = arith.constant 0 : index
    %13 = vector.load %arg6[%c0_10, %c0_11] : memref<16x128xf32, #tpu.memory_space<vmem>>, vector<16x128xf32>
    tpu.vector_store %arg6[%c0_10, %c0_11], %12 {strides = array<i32>} : memref<16x128xf32, #tpu.memory_space<vmem>>, vector<16x128xf32>,
    return
  }
  func.func @transform_0(%arg0: i32) -> (i32, i32) {
    %c0_i32 = arith.constant 0 : i32
    %c0_i32_0 = arith.constant 0 : i32
    return %arg0, %c0_i32 : i32, i32
  }
  func.func @transform_1(%arg0: i32) -> (i32, i32) {
    %c0_i32 = arith.constant 0 : i32
    %c0_i32_0 = arith.constant 0 : i32
    %c0_i32_1 = arith.constant 0 : i32
    return %c0_i32, %c0_i32_0 : i32, i32
  }
  func.func @transform_2(%arg0: i32) -> (i32, i32) {
    %c0_i32 = arith.constant 0 : i32
    %c0_i32_0 = arith.constant 0 : i32
    %c0_i32_1 = arith.constant 0 : i32
    return %c0_i32, %c0_i32_0 : i32, i32
  }
  func.func @transform_3(%arg0: i32) -> (i32, i32) {
    %c0_i32 = arith.constant 0 : i32
    %c0_i32_0 = arith.constant 0 : i32
    %c0_i32_1 = arith.constant 0 : i32
    return %c0_i32, %c0_i32_0 : i32, i32
  }
  func.func @transform_4(%arg0: i32) -> (i32, i32) {
    %c0_i32 = arith.constant 0 : i32
    %c0_i32_0 = arith.constant 0 : i32
    %c0_i32_1 = arith.constant 0 : i32
    return %c0_i32, %c0_i32_0 : i32, i32
  }
  func.func @transform_5(%arg0: i32) -> (i32, i32) {
    %c0_i32 = arith.constant 0 : i32
    %c0_i32_0 = arith.constant 0 : i32
    return %arg0, %c0_i32 : i32, i32
  }
}

</mosaic_0001>

<llo_original>
// kernel: antibiotic_predictor_forward.1
$region0: #{antibiotic_predictor_forward.1}
  #allocation0 [shape = 'u32[]', space=smem, size = 0x4, offset = 0x4, fixed_abs, tag = 'smem constant byte address 0x4 - core index']
  #allocation1 [shape = 'u32[72,128]{1,0:T(1,128)}', space=vmem, size = 0x9000, scoped, tag = 'internal scratch']
  %s0 = inlined_call_operand.hbm [shape: bf16[8,804], index: 0, kind: input, shape index: {}]
  %s1 = inlined_call_operand.hbm [shape: bf16[804,512], index: 1, kind: input, shape index: {}]
  %s2 = inlined_call_operand.hbm [shape: f32[1,512], index: 2, kind: input, shape index: {}]
  %s3 = inlined_call_operand.hbm [shape: bf16[512,128], index: 3, kind: input, shape index: {}]
  %s4 = inlined_call_operand.vmem [shape: f32[1,128], index: 4, kind: input, shape index: {}]
  %s5 = inlined_call_operand.hbm [shape: f32[8,128], index: 5, kind: output, shape index: {}]
  %s6 = sld [smem:[#allocation0]]
  $region46: #{antibiotic_predictor_forward.1} parent=0
    _
  %s8 = ssub.s32 1, %s6
  %s9 = scalar_select 0, %s8, %s6
  $region1: #{antibiotic_predictor_forward.1} parent=0
    #allocation2 [shape = 'u8[28672]{0}', space=vmem, size = 0x7000, scoped, tag = 'input window, operand 0, single buffered']
    #allocation3 [shape = 's32[1]{0}', space=sflag, size = 0x4, scoped, tag = 'scoped memory for antibiotic_predictor_forward.1']
    #allocation4 [shape = 's32[1]{0}', space=sflag, size = 0x4, scoped, tag = 'scoped memory for antibiotic_predictor_forward.1']
    #allocation5 [shape = 'u8[827392]{0}', space=vmem, size = 0xca000, scoped, tag = 'input window, operand 1, single buffered']
    #allocation6 [shape = 's32[1]{0}', space=sflag, size = 0x4, scoped, tag = 'scoped memory for antibiotic_predictor_forward.1']
    #allocation7 [shape = 'u8[2048]{0}', space=vmem, size = 0x800, scoped, tag = 'input window, operand 2, single buffered']
    #allocation8 [shape = 'u8[131072]{0}', space=vmem, size = 0x20000, scoped, tag = 'input window, operand 3, single buffered']
    #allocation9 [shape = 's32[1]{0}', space=sflag, size = 0x4, scoped, tag = 'scoped memory for antibiotic_predictor_forward.1']
    #allocation10 [shape = 'u8[8192]{0}', space=vmem, size = 0x2000, scoped, tag = 'output window, operand 0, single buffered']
    %10 = vsyncpa [#allocation3], 0
    %11 = vsyncpa [#allocation6], 0
    %12 = vsyncpa [#allocation9], 0
    %13 = vsyncpa [#allocation4], 0
    // Predicated region
    $region2: #{antibiotic_predictor_forward.1} parent=1 // pred_check
      _
    $region3: #{antibiotic_predictor_forward.1} parent=1 // pred_check_branch
      %15 = sbr.rel (0) target = $region5
    $region4: #{antibiotic_predictor_forward.1} parent=1 // pred_region
      %17 = vsyncadd [#allocation3], 448
      %s18 = sshll.u32 %s0, 4
      %s19 = int_to_ptr.hbm [resolvable:$true] %s18
      %s20 = sshll.u32 [#allocation2], 4
      %s21 = int_to_ptr.vmem [resolvable:$true] %s20
      %26 = dma.hbm_to_vmem [thread:$0]  %s19, 448, %s21, [#allocation3], 448, 448, 28
    $region5: #{antibiotic_predictor_forward.1} parent=1 // pred_fallthru
      _
    // Predicated region
    $region6: #{antibiotic_predictor_forward.1} parent=1 // pred_check
      _
    $region7: #{antibiotic_predictor_forward.1} parent=1 // pred_check_branch
      %28 = sbr.rel (0) target = $region9
    $region8: #{antibiotic_predictor_forward.1} parent=1 // pred_region
      %30 = vsyncadd [#allocation6], 0
      %s31 = sshll.u32 %s1, 4
      %s32 = int_to_ptr.hbm [resolvable:$true] %s31
      %s33 = sshll.u32 [#allocation5], 4
      %s34 = int_to_ptr.vmem [resolvable:$true] %s33
      %39 = dma.hbm_to_vmem [thread:$0]  %s32, 25856, %s34, [#allocation6], 256, 256, 16
    $region9: #{antibiotic_predictor_forward.1} parent=1 // pred_fallthru
      _
    // Predicated region
    $region10: #{antibiotic_predictor_forward.1} parent=1 // pred_check
      _
    $region11: #{antibiotic_predictor_forward.1} parent=1 // pred_check_branch
      %41 = sbr.rel (0) target = $region13
    $region12: #{antibiotic_predictor_forward.1} parent=1 // pred_region
      %43 = vsyncadd [#allocation6], 0
      %s45 = sshll.u32 %s2, 4
      %s46 = int_to_ptr.hbm [resolvable:$true] %s45
      %s47 = sshll.u32 [#allocation7], 4
      %s48 = int_to_ptr.vmem [resolvable:$true] %s47
      %50 = dma.hbm_to_vmem [thread:$0]  %s46, 64, %s48, [#allocation6]
    $region13: #{antibiotic_predictor_forward.1} parent=1 // pred_fallthru
      _
    // Predicated region
    $region14: #{antibiotic_predictor_forward.1} parent=1 // pred_check
      _
    $region15: #{antibiotic_predictor_forward.1} parent=1 // pred_check_branch
      %52 = sbr.rel (0) target = $region17
    $region16: #{antibiotic_predictor_forward.1} parent=1 // pred_region
      %54 = vsyncadd [#allocation9], 0
      %s55 = sshll.u32 %s3, 4
      %s56 = int_to_ptr.hbm [resolvable:$true] %s55
      %s57 = sshll.u32 [#allocation8], 4
      %s58 = int_to_ptr.vmem [resolvable:$true] %s57
      %63 = dma.hbm_to_vmem [thread:$0]  %s56, 4096, %s58, [#allocation9], 64, 64, 4
    $region17: #{antibiotic_predictor_forward.1} parent=1 // pred_fallthru
      _
    // Predicated region
    $region18: #{antibiotic_predictor_forward.1} parent=1 // pred_check
      _
    $region19: #{antibiotic_predictor_forward.1} parent=1 // pred_check_branch
      %65 = sbr.rel (0) target = $region21
    $region20: #{antibiotic_predictor_forward.1} parent=1 // pred_region
      _
    $region21: #{antibiotic_predictor_forward.1} parent=1 // pred_fallthru
      _
    // Predicated region
    $region22: #{antibiotic_predictor_forward.1} parent=1 // pred_check
      _
    $region23: #{antibiotic_predictor_forward.1} parent=1 // pred_check_branch
      %67 = sbr.rel (0) target = $region25
    $region24: #{antibiotic_predictor_forward.1} parent=1 // pred_region
      %69 = dma.done [#allocation3], 896
    $region25: #{antibiotic_predictor_forward.1} parent=1 // pred_fallthru
      _
    // Predicated region
    $region26: #{antibiotic_predictor_forward.1} parent=1 // pred_check
      _
    $region27: #{antibiotic_predictor_forward.1} parent=1 // pred_check_branch
      %71 = sbr.rel (0) target = $region29
    $region28: #{antibiotic_predictor_forward.1} parent=1 // pred_region
      %73 = dma.done [#allocation6], 25856
    $region29: #{antibiotic_predictor_forward.1} parent=1 // pred_fallthru
      _
    // Predicated region
    $region30: #{antibiotic_predictor_forward.1} parent=1 // pred_check
      _
    $region31: #{antibiotic_predictor_forward.1} parent=1 // pred_check_branch
      %75 = sbr.rel (0) target = $region33
    $region32: #{antibiotic_predictor_forward.1} parent=1 // pred_region
      %77 = dma.done [#allocation6], 64
    $region33: #{antibiotic_predictor_forward.1} parent=1 // pred_fallthru
      _
    // Predicated region
    $region34: #{antibiotic_predictor_forward.1} parent=1 // pred_check
      _
    $region35: #{antibiotic_predictor_forward.1} parent=1 // pred_check_branch
      %79 = sbr.rel (0) target = $region37
    $region36: #{antibiotic_predictor_forward.1} parent=1 // pred_region
      %81 = dma.done [#allocation9], 4096
    $region37: #{antibiotic_predictor_forward.1} parent=1 // pred_fallthru
      _
    %v83 = vld [vmem:[#allocation2] sm:$0xff]
    %v84 = vld [vmem:[#allocation2 + $0x8] sm:$0xff]
    %v85 = vld [vmem:[#allocation2 + $0x10] sm:$0xff]
    %v86 = vld [vmem:[#allocation2 + $0x18] sm:$0xf]
    %v87 = vld [vmem:[#allocation2 + $0x1c] sm:$0xff]
    %v88 = vld [vmem:[#allocation2 + $0x24] sm:$0xff]
    %v89 = vld [vmem:[#allocation2 + $0x2c] sm:$0xff]
    %v90 = vld [vmem:[#allocation2 + $0x34] sm:$0xf]
    %v91 = vld [vmem:[#allocation5] sm:$0xff]
    %v92 = vld [vmem:[#allocation5 + $0x8] sm:$0xff]
    %v93 = vld [vmem:[#allocation5 + $0x10] sm:$0xff]
    %v94 = vld [vmem:[#allocation5 + $0x18] sm:$0xff]
    %v95 = vld [vmem:[#allocation5 + $0x20] sm:$0xff]
    %v96 = vld [vmem:[#allocation5 + $0x28] sm:$0xff]
    %v97 = vld [vmem:[#allocation5 + $0x30] sm:$0xff]
    %v98 = vld [vmem:[#allocation5 + $0x38] sm:$0xff]
    %v99 = vld [vmem:[#allocation5 + $0x40] sm:$0xff]
    %v100 = vld [vmem:[#allocation5 + $0x48] sm:$0xff]
    %v101 = vld [vmem:[#allocation5 + $0x50] sm:$0xff]
    %v102 = vld [vmem:[#allocation5 + $0x58] sm:$0xff]
    %v103 = vld [vmem:[#allocation5 + $0x60] sm:$0xff]
    %v104 = vld [vmem:[#allocation5 + $0x68] sm:$0xff]
    %v105 = vld [vmem:[#allocation5 + $0x70] sm:$0xff]
    %v106 = vld [vmem:[#allocation5 + $0x78] sm:$0xff]
    %v107 = vld [vmem:[#allocation5 + $0x80] sm:$0xff]
    %v108 = vld [vmem:[#allocation5 + $0x88] sm:$0xff]
    %v109 = vld [vmem:[#allocation5 + $0x90] sm:$0xff]
    %v110 = vld [vmem:[#allocation5 + $0x98] sm:$0xff]
    %v111 = vld [vmem:[#allocation5 + $0xa0] sm:$0xff]
    %v112 = vld [vmem:[#allocation5 + $0xa8] sm:$0xff]
    %v113 = vld [vmem:[#allocation5 + $0xb0] sm:$0xff]
    %v114 = vld [vmem:[#allocation5 + $0xb8] sm:$0xff]
    %v115 = vld [vmem:[#allocation5 + $0xc0] sm:$0xff]
    %v116 = vld [vmem:[#allocation5 + $0xc8] sm:$0xff]
    %v117 = vld [vmem:[#allocation5 + $0xd0] sm:$0xff]
    %v118 = vld [vmem:[#allocation5 + $0xd8] sm:$0xff]
    %v119 = vld [vmem:[#allocation5 + $0xe0] sm:$0xff]
    %v120 = vld [vmem:[#allocation5 + $0xe8] sm:$0xff]
    %v121 = vld [vmem:[#allocation5 + $0xf0] sm:$0xff]
    %v122 = vld [vmem:[#allocation5 + $0xf8] sm:$0xff]
    %v123 = vld [vmem:[#allocation5 + $0x100] sm:$0xff]
    %v124 = vld [vmem:[#allocation5 + $0x108] sm:$0xff]
    %v125 = vld [vmem:[#allocation5 + $0x110] sm:$0xff]
    %v126 = vld [vmem:[#allocation5 + $0x118] sm:$0xff]
    %v127 = vld [vmem:[#allocation5 + $0x120] sm:$0xff]
    %v128 = vld [vmem:[#allocation5 + $0x128] sm:$0xff]
    %v129 = vld [vmem:[#allocation5 + $0x130] sm:$0xff]
    %v130 = vld [vmem:[#allocation5 + $0x138] sm:$0xff]
    %v131 = vld [vmem:[#allocation5 + $0x140] sm:$0xff]
    %v132 = vld [vmem:[#allocation5 + $0x148] sm:$0xff]
    %v133 = vld [vmem:[#allocation5 + $0x150] sm:$0xff]
    %v134 = vld [vmem:[#allocation5 + $0x158] sm:$0xff]
    %v135 = vld [vmem:[#allocation5 + $0x160] sm:$0xff]
    %v136 = vld [vmem:[#allocation5 + $0x168] sm:$0xff]
    %v137 = vld [vmem:[#allocation5 + $0x170] sm:$0xff]
    %v138 = vld [vmem:[#allocation5 + $0x178] sm:$0xff]
    %v139 = vld [vmem:[#allocation5 + $0x180] sm:$0xff]
    %v140 = vld [vmem:[#allocation5 + $0x188] sm:$0xff]
    %v141 = vld [vmem:[#allocation5 + $0x190] sm:$0xff]
    %v142 = vld [vmem:[#allocation5 + $0x198] sm:$0xff]
    %v143 = vld [vmem:[#allocation5 + $0x1a0] sm:$0xff]
    %v144 = vld [vmem:[#allocation5 + $0x1a8] sm:$0xff]
    %v145 = vld [vmem:[#allocation5 + $0x1b0] sm:$0xff]
    %v146 = vld [vmem:[#allocation5 + $0x1b8] sm:$0xff]
    %v147 = vld [vmem:[#allocation5 + $0x1c0] sm:$0xff]
    %v148 = vld [vmem:[#allocation5 + $0x1c8] sm:$0xff]
    %v149 = vld [vmem:[#allocation5 + $0x1d0] sm:$0xff]
    %v150 = vld [vmem:[#allocation5 + $0x1d8] sm:$0xff]
    %v151 = vld [vmem:[#allocation5 + $0x1e0] sm:$0xff]
    %v152 = vld [vmem:[#allocation5 + $0x1e8] sm:$0xff]
    %v153 = vld [vmem:[#allocation5 + $0x1f0] sm:$0xff]
    %v154 = vld [vmem:[#allocation5 + $0x1f8] sm:$0xff]
    %v155 = vld [vmem:[#allocation5 + $0x200] sm:$0xff]
    %v156 = vld [vmem:[#allocation5 + $0x208] sm:$0xff]
    %v157 = vld [vmem:[#allocation5 + $0x210] sm:$0xff]
    %v158 = vld [vmem:[#allocation5 + $0x218] sm:$0xff]
    %v159 = vld [vmem:[#allocation5 + $0x220] sm:$0xff]
    %v160 = vld [vmem:[#allocation5 + $0x228] sm:$0xff]
    %v161 = vld [vmem:[#allocation5 + $0x230] sm:$0xff]
    %v162 = vld [vmem:[#allocation5 + $0x238] sm:$0xff]
    %v163 = vld [vmem:[#allocation5 + $0x240] sm:$0xff]
    %v164 = vld [vmem:[#allocation5 + $0x248] sm:$0xff]
    %v165 = vld [vmem:[#allocation5 + $0x250] sm:$0xff]
    %v166 = vld [vmem:[#allocation5 + $0x258] sm:$0xff]
    %v167 = vld [vmem:[#allocation5 + $0x260] sm:$0xff]
    %v168 = vld [vmem:[#allocation5 + $0x268] sm:$0xff]
    %v169 = vld [vmem:[#allocation5 + $0x270] sm:$0xff]
    %v170 = vld [vmem:[#allocation5 + $0x278] sm:$0xff]
    %v171 = vld [vmem:[#allocation5 + $0x280] sm:$0xff]
    %v172 = vld [vmem:[#allocation5 + $0x288] sm:$0xff]
    %v173 = vld [vmem:[#allocation5 + $0x290] sm:$0xff]
    %v174 = vld [vmem:[#allocation5 + $0x298] sm:$0xff]
    %v175 = vld [vmem:[#allocation5 + $0x2a0] sm:$0xff]
    %v176 = vld [vmem:[#allocation5 + $0x2a8] sm:$0xff]
    %v177 = vld [vmem:[#allocation5 + $0x2b0] sm:$0xff]
    %v178 = vld [vmem:[#allocation5 + $0x2b8] sm:$0xff]
    %v179 = vld [vmem:[#allocation5 + $0x2c0] sm:$0xff]
    %v180 = vld [vmem:[#allocation5 + $0x2c8] sm:$0xff]
    %v181 = vld [vmem:[#allocation5 + $0x2d0] sm:$0xff]
    %v182 = vld [vmem:[#allocation5 + $0x2d8] sm:$0xff]
    %v183 = vld [vmem:[#allocation5 + $0x2e0] sm:$0xff]
    %v184 = vld [vmem:[#allocation5 + $0x2e8] sm:$0xff]
    %v185 = vld [vmem:[#allocation5 + $0x2f0] sm:$0xff]
    %v186 = vld [vmem:[#allocation5 + $0x2f8] sm:$0xff]
    %v187 = vld [vmem:[#allocation5 + $0x300] sm:$0xff]
    %v188 = vld [vmem:[#allocation5 + $0x308] sm:$0xff]
    %v189 = vld [vmem:[#allocation5 + $0x310] sm:$0xff]
    %v190 = vld [vmem:[#allocation5 + $0x318] sm:$0xff]
    %v191 = vld [vmem:[#allocation5 + $0x320] sm:$0xff]
    %v192 = vld [vmem:[#allocation5 + $0x328] sm:$0xff]
    %v193 = vld [vmem:[#allocation5 + $0x330] sm:$0xff]
    %v194 = vld [vmem:[#allocation5 + $0x338] sm:$0xff]
    %v195 = vld [vmem:[#allocation5 + $0x340] sm:$0xff]
    %v196 = vld [vmem:[#allocation5 + $0x348] sm:$0xff]
    %v197 = vld [vmem:[#allocation5 + $0x350] sm:$0xff]
    %v198 = vld [vmem:[#allocation5 + $0x358] sm:$0xff]
    %v199 = vld [vmem:[#allocation5 + $0x360] sm:$0xff]
    %v200 = vld [vmem:[#allocation5 + $0x368] sm:$0xff]
    %v201 = vld [vmem:[#allocation5 + $0x370] sm:$0xff]
    %v202 = vld [vmem:[#allocation5 + $0x378] sm:$0xff]
    %v203 = vld [vmem:[#allocation5 + $0x380] sm:$0xff]
    %v204 = vld [vmem:[#allocation5 + $0x388] sm:$0xff]
    %v205 = vld [vmem:[#allocation5 + $0x390] sm:$0xff]
    %v206 = vld [vmem:[#allocation5 + $0x398] sm:$0xff]
    %v207 = vld [vmem:[#allocation5 + $0x3a0] sm:$0xff]
    %v208 = vld [vmem:[#allocation5 + $0x3a8] sm:$0xff]
    %v209 = vld [vmem:[#allocation5 + $0x3b0] sm:$0xff]
    %v210 = vld [vmem:[#allocation5 + $0x3b8] sm:$0xff]
    %v211 = vld [vmem:[#allocation5 + $0x3c0] sm:$0xff]
    %v212 = vld [vmem:[#allocation5 + $0x3c8] sm:$0xff]
    %v213 = vld [vmem:[#allocation5 + $0x3d0] sm:$0xff]
    %v214 = vld [vmem:[#allocation5 + $0x3d8] sm:$0xff]
    %v215 = vld [vmem:[#allocation5 + $0x3e0] sm:$0xff]
    %v216 = vld [vmem:[#allocation5 + $0x3e8] sm:$0xff]
    %v217 = vld [vmem:[#allocation5 + $0x3f0] sm:$0xff]
    %v218 = vld [vmem:[#allocation5 + $0x3f8] sm:$0xff]
    %v219 = vld [vmem:[#allocation5 + $0x400] sm:$0xff]
    %v220 = vld [vmem:[#allocation5 + $0x408] sm:$0xff]
    %v221 = vld [vmem:[#allocation5 + $0x410] sm:$0xff]
    %v222 = vld [vmem:[#allocation5 + $0x418] sm:$0xff]
    %v223 = vld [vmem:[#allocation5 + $0x420] sm:$0xff]
    %v224 = vld [vmem:[#allocation5 + $0x428] sm:$0xff]
    %v225 = vld [vmem:[#allocation5 + $0x430] sm:$0xff]
    %v226 = vld [vmem:[#allocation5 + $0x438] sm:$0xff]
    %v227 = vld [vmem:[#allocation5 + $0x440] sm:$0xff]
    %v228 = vld [vmem:[#allocation5 + $0x448] sm:$0xff]
    %v229 = vld [vmem:[#allocation5 + $0x450] sm:$0xff]
    %v230 = vld [vmem:[#allocation5 + $0x458] sm:$0xff]
    %v231 = vld [vmem:[#allocation5 + $0x460] sm:$0xff]
    %v232 = vld [vmem:[#allocation5 + $0x468] sm:$0xff]
    %v233 = vld [vmem:[#allocation5 + $0x470] sm:$0xff]
    %v234 = vld [vmem:[#allocation5 + $0x478] sm:$0xff]
    %v235 = vld [vmem:[#allocation5 + $0x480] sm:$0xff]
    %v236 = vld [vmem:[#allocation5 + $0x488] sm:$0xff]
    %v237 = vld [vmem:[#allocation5 + $0x490] sm:$0xff]
    %v238 = vld [vmem:[#allocation5 + $0x498] sm:$0xff]
    %v239 = vld [vmem:[#allocation5 + $0x4a0] sm:$0xff]
    %v240 = vld [vmem:[#allocation5 + $0x4a8] sm:$0xff]
    %v241 = vld [vmem:[#allocation5 + $0x4b0] sm:$0xff]
    %v242 = vld [vmem:[#allocation5 + $0x4b8] sm:$0xff]
    %v243 = vld [vmem:[#allocation5 + $0x4c0] sm:$0xff]
    %v244 = vld [vmem:[#allocation5 + $0x4c8] sm:$0xff]
    %v245 = vld [vmem:[#allocation5 + $0x4d0] sm:$0xff]
    %v246 = vld [vmem:[#allocation5 + $0x4d8] sm:$0xff]
    %v247 = vld [vmem:[#allocation5 + $0x4e0] sm:$0xff]
    %v248 = vld [vmem:[#allocation5 + $0x4e8] sm:$0xff]
    %v249 = vld [vmem:[#allocation5 + $0x4f0] sm:$0xff]
    %v250 = vld [vmem:[#allocation5 + $0x4f8] sm:$0xff]
    %v251 = vld [vmem:[#allocation5 + $0x500] sm:$0xff]
    %v252 = vld [vmem:[#allocation5 + $0x508] sm:$0xff]
    %v253 = vld [vmem:[#allocation5 + $0x510] sm:$0xff]
    %v254 = vld [vmem:[#allocation5 + $0x518] sm:$0xff]
    %v255 = vld [vmem:[#allocation5 + $0x520] sm:$0xff]
    %v256 = vld [vmem:[#allocation5 + $0x528] sm:$0xff]
    %v257 = vld [vmem:[#allocation5 + $0x530] sm:$0xff]
    %v258 = vld [vmem:[#allocation5 + $0x538] sm:$0xff]
    %v259 = vld [vmem:[#allocation5 + $0x540] sm:$0xff]
    %v260 = vld [vmem:[#allocation5 + $0x548] sm:$0xff]
    %v261 = vld [vmem:[#allocation5 + $0x550] sm:$0xff]
    %v262 = vld [vmem:[#allocation5 + $0x558] sm:$0xff]
    %v263 = vld [vmem:[#allocation5 + $0x560] sm:$0xff]
    %v264 = vld [vmem:[#allocation5 + $0x568] sm:$0xff]
    %v265 = vld [vmem:[#allocation5 + $0x570] sm:$0xff]
    %v266 = vld [vmem:[#allocation5 + $0x578] sm:$0xff]
    %v267 = vld [vmem:[#allocation5 + $0x580] sm:$0xff]
    %v268 = vld [vmem:[#allocation5 + $0x588] sm:$0xff]
    %v269 = vld [vmem:[#allocation5 + $0x590] sm:$0xff]
    %v270 = vld [vmem:[#allocation5 + $0x598] sm:$0xff]
    %v271 = vld [vmem:[#allocation5 + $0x5a0] sm:$0xff]
    %v272 = vld [vmem:[#allocation5 + $0x5a8] sm:$0xff]
    %v273 = vld [vmem:[#allocation5 + $0x5b0] sm:$0xff]
    %v274 = vld [vmem:[#allocation5 + $0x5b8] sm:$0xff]
    %v275 = vld [vmem:[#allocation5 + $0x5c0] sm:$0xff]
    %v276 = vld [vmem:[#allocation5 + $0x5c8] sm:$0xff]
    %v277 = vld [vmem:[#allocation5 + $0x5d0] sm:$0xff]
    %v278 = vld [vmem:[#allocation5 + $0x5d8] sm:$0xff]
    %v279 = vld [vmem:[#allocation5 + $0x5e0] sm:$0xff]
    %v280 = vld [vmem:[#allocation5 + $0x5e8] sm:$0xff]
    %v281 = vld [vmem:[#allocation5 + $0x5f0] sm:$0xff]
    %v282 = vld [vmem:[#allocation5 + $0x5f8] sm:$0xff]
    %v283 = vld [vmem:[#allocation5 + $0x600] sm:$0xff]
    %v284 = vld [vmem:[#allocation5 + $0x608] sm:$0xff]
    %v285 = vld [vmem:[#allocation5 + $0x610] sm:$0xff]
    %v286 = vld [vmem:[#allocation5 + $0x618] sm:$0xff]
    %v287 = vld [vmem:[#allocation5 + $0x620] sm:$0xff]
    %v288 = vld [vmem:[#allocation5 + $0x628] sm:$0xff]
    %v289 = vld [vmem:[#allocation5 + $0x630] sm:$0xff]
    %v290 = vld [vmem:[#allocation5 + $0x638] sm:$0xff]
    %v291 = vld [vmem:[#allocation5 + $0x640] sm:$0x33]
    %v292 = vld [vmem:[#allocation5 + $0x648] sm:$0x33]
    %v293 = vld [vmem:[#allocation7] sm:$0xf]
    %v295 = vperm.slane %v293, 0
    %v296 = vperm.slane %v293, 1
    %v297 = vperm.slane %v293, 2
    %v298 = vperm.slane %v293, 3
    %v311 = vunpack.c.l.b16 %v83
    %v312 = vunpack.c.h.b16 %v83
    %v313 = vunpack.c.l.b16 %v84
    %v314 = vunpack.c.h.b16 %v84
    %v315 = vunpack.c.l.b16 %v85
    %v316 = vunpack.c.h.b16 %v85
    %v317 = vunpack.c.l.b16 %v86
    %v318 = vunpack.c.l.b16 %v87
    %v319 = vunpack.c.h.b16 %v87
    %v320 = vunpack.c.l.b16 %v88
    %v321 = vunpack.c.h.b16 %v88
    %v322 = vunpack.c.l.b16 %v89
    %v323 = vunpack.c.h.b16 %v89
    %v324 = vunpack.c.l.b16 %v90
    %v325 = vpack.c.b16 %v318, %v311
    %v326 = vpack.c.b16 %v319, %v312
    %v327 = vpack.c.b16 %v320, %v313
    %v328 = vpack.c.b16 %v321, %v314
    %v329 = vpack.c.b16 %v322, %v315
    %v330 = vpack.c.b16 %v323, %v316
    %v331 = vpack.c.b16 %v324, %v317
    %v540 = vunpack.c.l.b16 %v91
    %v541 = vunpack.c.h.b16 %v91
    %v542 = vunpack.c.l.b16 %v92
    %v543 = vunpack.c.h.b16 %v92
    %v544 = vunpack.c.l.b16 %v93
    %v545 = vunpack.c.h.b16 %v93
    %v546 = vunpack.c.l.b16 %v94
    %v547 = vunpack.c.h.b16 %v94
    %v548 = vunpack.c.l.b16 %v95
    %v549 = vunpack.c.h.b16 %v95
    %v550 = vunpack.c.l.b16 %v96
    %v551 = vunpack.c.h.b16 %v96
    %v552 = vunpack.c.l.b16 %v97
    %v553 = vunpack.c.h.b16 %v97
    %v554 = vunpack.c.l.b16 %v98
    %v555 = vunpack.c.h.b16 %v98
    %v556 = vunpack.c.l.b16 %v99
    %v557 = vunpack.c.h.b16 %v99
    %v558 = vunpack.c.l.b16 %v100
    %v559 = vunpack.c.h.b16 %v100
    %v560 = vunpack.c.l.b16 %v101
    %v561 = vunpack.c.h.b16 %v101
    %v562 = vunpack.c.l.b16 %v102
    %v563 = vunpack.c.h.b16 %v102
    %v564 = vunpack.c.l.b16 %v103
    %v565 = vunpack.c.h.b16 %v103
    %v566 = vunpack.c.l.b16 %v104
    %v567 = vunpack.c.h.b16 %v104
    %v568 = vunpack.c.l.b16 %v105
    %v569 = vunpack.c.h.b16 %v105
    %v570 = vunpack.c.l.b16 %v106
    %v571 = vunpack.c.h.b16 %v106
    %v572 = vunpack.c.l.b16 %v107
    %v573 = vunpack.c.h.b16 %v107
    %v574 = vunpack.c.l.b16 %v108
    %v575 = vunpack.c.h.b16 %v108
    %v576 = vunpack.c.l.b16 %v109
    %v577 = vunpack.c.h.b16 %v109
    %v578 = vunpack.c.l.b16 %v110
    %v579 = vunpack.c.h.b16 %v110
    %v580 = vunpack.c.l.b16 %v111
    %v581 = vunpack.c.h.b16 %v111
    %v582 = vunpack.c.l.b16 %v112
    %v583 = vunpack.c.h.b16 %v112
    %v584 = vunpack.c.l.b16 %v113
    %v585 = vunpack.c.h.b16 %v113
    %v586 = vunpack.c.l.b16 %v114
    %v587 = vunpack.c.h.b16 %v114
    %v588 = vunpack.c.l.b16 %v115
    %v589 = vunpack.c.h.b16 %v115
    %v590 = vunpack.c.l.b16 %v116
    %v591 = vunpack.c.h.b16 %v116
    %v592 = vunpack.c.l.b16 %v117
    %v593 = vunpack.c.h.b16 %v117
    %v594 = vunpack.c.l.b16 %v118
    %v595 = vunpack.c.h.b16 %v118
    %v596 = vunpack.c.l.b16 %v119
    %v597 = vunpack.c.h.b16 %v119
    %v598 = vunpack.c.l.b16 %v120
    %v599 = vunpack.c.h.b16 %v120
    %v600 = vunpack.c.l.b16 %v121
    %v601 = vunpack.c.h.b16 %v121
    %v602 = vunpack.c.l.b16 %v122
    %v603 = vunpack.c.h.b16 %v122
    %v604 = vunpack.c.l.b16 %v123
    %v605 = vunpack.c.h.b16 %v123
    %v606 = vunpack.c.l.b16 %v124
    %v607 = vunpack.c.h.b16 %v124
    %v608 = vunpack.c.l.b16 %v125
    %v609 = vunpack.c.h.b16 %v125
    %v610 = vunpack.c.l.b16 %v126
    %v611 = vunpack.c.h.b16 %v126
    %v612 = vunpack.c.l.b16 %v127
    %v613 = vunpack.c.h.b16 %v127
    %v614 = vunpack.c.l.b16 %v128
    %v615 = vunpack.c.h.b16 %v128
    %v616 = vunpack.c.l.b16 %v129
    %v617 = vunpack.c.h.b16 %v129
    %v618 = vunpack.c.l.b16 %v130
    %v619 = vunpack.c.h.b16 %v130
    %v620 = vunpack.c.l.b16 %v131
    %v621 = vunpack.c.h.b16 %v131
    %v622 = vunpack.c.l.b16 %v132
    %v623 = vunpack.c.h.b16 %v132
    %v624 = vunpack.c.l.b16 %v133
    %v625 = vunpack.c.h.b16 %v133
    %v626 = vunpack.c.l.b16 %v134
    %v627 = vunpack.c.h.b16 %v134
    %v628 = vunpack.c.l.b16 %v135
    %v629 = vunpack.c.h.b16 %v135
    %v630 = vunpack.c.l.b16 %v136
    %v631 = vunpack.c.h.b16 %v136
    %v632 = vunpack.c.l.b16 %v137
    %v633 = vunpack.c.h.b16 %v137
    %v634 = vunpack.c.l.b16 %v138
    %v635 = vunpack.c.h.b16 %v138
    %v636 = vunpack.c.l.b16 %v139
    %v637 = vunpack.c.h.b16 %v139
    %v638 = vunpack.c.l.b16 %v140
    %v639 = vunpack.c.h.b16 %v140
    %v640 = vunpack.c.l.b16 %v141
    %v641 = vunpack.c.h.b16 %v141
    %v642 = vunpack.c.l.b16 %v142
    %v643 = vunpack.c.h.b16 %v142
    %v644 = vunpack.c.l.b16 %v143
    %v645 = vunpack.c.h.b16 %v143
    %v646 = vunpack.c.l.b16 %v144
    %v647 = vunpack.c.h.b16 %v144
    %v648 = vunpack.c.l.b16 %v145
    %v649 = vunpack.c.h.b16 %v145
    %v650 = vunpack.c.l.b16 %v146
    %v651 = vunpack.c.h.b16 %v146
    %v652 = vunpack.c.l.b16 %v147
    %v653 = vunpack.c.h.b16 %v147
    %v654 = vunpack.c.l.b16 %v148
    %v655 = vunpack.c.h.b16 %v148
    %v656 = vunpack.c.l.b16 %v149
    %v657 = vunpack.c.h.b16 %v149
    %v658 = vunpack.c.l.b16 %v150
    %v659 = vunpack.c.h.b16 %v150
    %v660 = vunpack.c.l.b16 %v151
    %v661 = vunpack.c.h.b16 %v151
    %v662 = vunpack.c.l.b16 %v152
    %v663 = vunpack.c.h.b16 %v152
    %v664 = vunpack.c.l.b16 %v153
    %v665 = vunpack.c.h.b16 %v153
    %v666 = vunpack.c.l.b16 %v154
    %v667 = vunpack.c.h.b16 %v154
    %v668 = vunpack.c.l.b16 %v155
    %v669 = vunpack.c.h.b16 %v155
    %v670 = vunpack.c.l.b16 %v156
    %v671 = vunpack.c.h.b16 %v156
    %v672 = vunpack.c.l.b16 %v157
    %v673 = vunpack.c.h.b16 %v157
    %v674 = vunpack.c.l.b16 %v158
    %v675 = vunpack.c.h.b16 %v158
    %v676 = vunpack.c.l.b16 %v159
    %v677 = vunpack.c.h.b16 %v159
    %v678 = vunpack.c.l.b16 %v160
    %v679 = vunpack.c.h.b16 %v160
    %v680 = vunpack.c.l.b16 %v161
    %v681 = vunpack.c.h.b16 %v161
    %v682 = vunpack.c.l.b16 %v162
    %v683 = vunpack.c.h.b16 %v162
    %v684 = vunpack.c.l.b16 %v163
    %v685 = vunpack.c.h.b16 %v163
    %v686 = vunpack.c.l.b16 %v164
    %v687 = vunpack.c.h.b16 %v164
    %v688 = vunpack.c.l.b16 %v165
    %v689 = vunpack.c.h.b16 %v165
    %v690 = vunpack.c.l.b16 %v166
    %v691 = vunpack.c.h.b16 %v166
    %v692 = vunpack.c.l.b16 %v167
    %v693 = vunpack.c.h.b16 %v167
    %v694 = vunpack.c.l.b16 %v168
    %v695 = vunpack.c.h.b16 %v168
    %v696 = vunpack.c.l.b16 %v169
    %v697 = vunpack.c.h.b16 %v169
    %v698 = vunpack.c.l.b16 %v170
    %v699 = vunpack.c.h.b16 %v170
    %v700 = vunpack.c.l.b16 %v171
    %v701 = vunpack.c.h.b16 %v171
    %v702 = vunpack.c.l.b16 %v172
    %v703 = vunpack.c.h.b16 %v172
    %v704 = vunpack.c.l.b16 %v173
    %v705 = vunpack.c.h.b16 %v173
    %v706 = vunpack.c.l.b16 %v174
    %v707 = vunpack.c.h.b16 %v174
    %v708 = vunpack.c.l.b16 %v175
    %v709 = vunpack.c.h.b16 %v175
    %v710 = vunpack.c.l.b16 %v176
    %v711 = vunpack.c.h.b16 %v176
    %v712 = vunpack.c.l.b16 %v177
    %v713 = vunpack.c.h.b16 %v177
    %v714 = vunpack.c.l.b16 %v178
    %v715 = vunpack.c.h.b16 %v178
    %v716 = vunpack.c.l.b16 %v179
    %v717 = vunpack.c.h.b16 %v179
    %v718 = vunpack.c.l.b16 %v180
    %v719 = vunpack.c.h.b16 %v180
    %v720 = vunpack.c.l.b16 %v181
    %v721 = vunpack.c.h.b16 %v181
    %v722 = vunpack.c.l.b16 %v182
    %v723 = vunpack.c.h.b16 %v182
    %v724 = vunpack.c.l.b16 %v183
    %v725 = vunpack.c.h.b16 %v183
    %v726 = vunpack.c.l.b16 %v184
    %v727 = vunpack.c.h.b16 %v184
    %v728 = vunpack.c.l.b16 %v185
    %v729 = vunpack.c.h.b16 %v185
    %v730 = vunpack.c.l.b16 %v186
    %v731 = vunpack.c.h.b16 %v186
    %v732 = vunpack.c.l.b16 %v187
    %v733 = vunpack.c.h.b16 %v187
    %v734 = vunpack.c.l.b16 %v188
    %v735 = vunpack.c.h.b16 %v188
    %v736 = vunpack.c.l.b16 %v189
    %v737 = vunpack.c.h.b16 %v189
    %v738 = vunpack.c.l.b16 %v190
    %v739 = vunpack.c.h.b16 %v190
    %v740 = vunpack.c.l.b16 %v191
    %v741 = vunpack.c.h.b16 %v191
    %v742 = vunpack.c.l.b16 %v192
    %v743 = vunpack.c.h.b16 %v192
    %v744 = vunpack.c.l.b16 %v193
    %v745 = vunpack.c.h.b16 %v193
    %v746 = vunpack.c.l.b16 %v194
    %v747 = vunpack.c.h.b16 %v194
    %v748 = vunpack.c.l.b16 %v195
    %v749 = vunpack.c.h.b16 %v195
    %v750 = vunpack.c.l.b16 %v196
    %v751 = vunpack.c.h.b16 %v196
    %v752 = vunpack.c.l.b16 %v197
    %v753 = vunpack.c.h.b16 %v197
    %v754 = vunpack.c.l.b16 %v198
    %v755 = vunpack.c.h.b16 %v198
    %v756 = vunpack.c.l.b16 %v199
    %v757 = vunpack.c.h.b16 %v199
    %v758 = vunpack.c.l.b16 %v200
    %v759 = vunpack.c.h.b16 %v200
    %v760 = vunpack.c.l.b16 %v201
    %v761 = vunpack.c.h.b16 %v201
    %v762 = vunpack.c.l.b16 %v202
    %v763 = vunpack.c.h.b16 %v202
    %v764 = vunpack.c.l.b16 %v203
    %v765 = vunpack.c.h.b16 %v203
    %v766 = vunpack.c.l.b16 %v204
    %v767 = vunpack.c.h.b16 %v204
    %v768 = vunpack.c.l.b16 %v205
    %v769 = vunpack.c.h.b16 %v205
    %v770 = vunpack.c.l.b16 %v206
    %v771 = vunpack.c.h.b16 %v206
    %v772 = vunpack.c.l.b16 %v207
    %v773 = vunpack.c.h.b16 %v207
    %v774 = vunpack.c.l.b16 %v208
    %v775 = vunpack.c.h.b16 %v208
    %v776 = vunpack.c.l.b16 %v209
    %v777 = vunpack.c.h.b16 %v209
    %v778 = vunpack.c.l.b16 %v210
    %v779 = vunpack.c.h.b16 %v210
    %v780 = vunpack.c.l.b16 %v211
    %v781 = vunpack.c.h.b16 %v211
    %v782 = vunpack.c.l.b16 %v212
    %v783 = vunpack.c.h.b16 %v212
    %v784 = vunpack.c.l.b16 %v213
    %v785 = vunpack.c.h.b16 %v213
    %v786 = vunpack.c.l.b16 %v214
    %v787 = vunpack.c.h.b16 %v214
    %v788 = vunpack.c.l.b16 %v215
    %v789 = vunpack.c.h.b16 %v215
    %v790 = vunpack.c.l.b16 %v216
    %v791 = vunpack.c.h.b16 %v216
    %v792 = vunpack.c.l.b16 %v217
    %v793 = vunpack.c.h.b16 %v217
    %v794 = vunpack.c.l.b16 %v218
    %v795 = vunpack.c.h.b16 %v218
    %v796 = vunpack.c.l.b16 %v219
    %v797 = vunpack.c.h.b16 %v219
    %v798 = vunpack.c.l.b16 %v220
    %v799 = vunpack.c.h.b16 %v220
    %v800 = vunpack.c.l.b16 %v221
    %v801 = vunpack.c.h.b16 %v221
    %v802 = vunpack.c.l.b16 %v222
    %v803 = vunpack.c.h.b16 %v222
    %v804 = vunpack.c.l.b16 %v223
    %v805 = vunpack.c.h.b16 %v223
    %v806 = vunpack.c.l.b16 %v224
    %v807 = vunpack.c.h.b16 %v224
    %v808 = vunpack.c.l.b16 %v225
    %v809 = vunpack.c.h.b16 %v225
    %v810 = vunpack.c.l.b16 %v226
    %v811 = vunpack.c.h.b16 %v226
    %v812 = vunpack.c.l.b16 %v227
    %v813 = vunpack.c.h.b16 %v227
    %v814 = vunpack.c.l.b16 %v228
    %v815 = vunpack.c.h.b16 %v228
    %v816 = vunpack.c.l.b16 %v229
    %v817 = vunpack.c.h.b16 %v229
    %v818 = vunpack.c.l.b16 %v230
    %v819 = vunpack.c.h.b16 %v230
    %v820 = vunpack.c.l.b16 %v231
    %v821 = vunpack.c.h.b16 %v231
    %v822 = vunpack.c.l.b16 %v232
    %v823 = vunpack.c.h.b16 %v232
    %v824 = vunpack.c.l.b16 %v233
    %v825 = vunpack.c.h.b16 %v233
    %v826 = vunpack.c.l.b16 %v234
    %v827 = vunpack.c.h.b16 %v234
    %v828 = vunpack.c.l.b16 %v235
    %v829 = vunpack.c.h.b16 %v235
    %v830 = vunpack.c.l.b16 %v236
    %v831 = vunpack.c.h.b16 %v236
    %v832 = vunpack.c.l.b16 %v237
    %v833 = vunpack.c.h.b16 %v237
    %v834 = vunpack.c.l.b16 %v238
    %v835 = vunpack.c.h.b16 %v238
    %v836 = vunpack.c.l.b16 %v239
    %v837 = vunpack.c.h.b16 %v239
    %v838 = vunpack.c.l.b16 %v240
    %v839 = vunpack.c.h.b16 %v240
    %v840 = vunpack.c.l.b16 %v241
    %v841 = vunpack.c.h.b16 %v241
    %v842 = vunpack.c.l.b16 %v242
    %v843 = vunpack.c.h.b16 %v242
    %v844 = vunpack.c.l.b16 %v243
    %v845 = vunpack.c.h.b16 %v243
    %v846 = vunpack.c.l.b16 %v244
    %v847 = vunpack.c.h.b16 %v244
    %v848 = vunpack.c.l.b16 %v245
    %v849 = vunpack.c.h.b16 %v245
    %v850 = vunpack.c.l.b16 %v246
    %v851 = vunpack.c.h.b16 %v246
    %v852 = vunpack.c.l.b16 %v247
    %v853 = vunpack.c.h.b16 %v247
    %v854 = vunpack.c.l.b16 %v248
    %v855 = vunpack.c.h.b16 %v248
    %v856 = vunpack.c.l.b16 %v249
    %v857 = vunpack.c.h.b16 %v249
    %v858 = vunpack.c.l.b16 %v250
    %v859 = vunpack.c.h.b16 %v250
    %v860 = vunpack.c.l.b16 %v251
    %v861 = vunpack.c.h.b16 %v251
    %v862 = vunpack.c.l.b16 %v252
    %v863 = vunpack.c.h.b16 %v252
    %v864 = vunpack.c.l.b16 %v253
    %v865 = vunpack.c.h.b16 %v253
    %v866 = vunpack.c.l.b16 %v254
    %v867 = vunpack.c.h.b16 %v254
    %v868 = vunpack.c.l.b16 %v255
    %v869 = vunpack.c.h.b16 %v255
    %v870 = vunpack.c.l.b16 %v256
    %v871 = vunpack.c.h.b16 %v256
    %v872 = vunpack.c.l.b16 %v257
    %v873 = vunpack.c.h.b16 %v257
    %v874 = vunpack.c.l.b16 %v258
    %v875 = vunpack.c.h.b16 %v258
    %v876 = vunpack.c.l.b16 %v259
    %v877 = vunpack.c.h.b16 %v259
    %v878 = vunpack.c.l.b16 %v260
    %v879 = vunpack.c.h.b16 %v260
    %v880 = vunpack.c.l.b16 %v261
    %v881 = vunpack.c.h.b16 %v261
    %v882 = vunpack.c.l.b16 %v262
    %v883 = vunpack.c.h.b16 %v262
    %v884 = vunpack.c.l.b16 %v263
    %v885 = vunpack.c.h.b16 %v263
    %v886 = vunpack.c.l.b16 %v264
    %v887 = vunpack.c.h.b16 %v264
    %v888 = vunpack.c.l.b16 %v265
    %v889 = vunpack.c.h.b16 %v265
    %v890 = vunpack.c.l.b16 %v266
    %v891 = vunpack.c.h.b16 %v266
    %v892 = vunpack.c.l.b16 %v267
    %v893 = vunpack.c.h.b16 %v267
    %v894 = vunpack.c.l.b16 %v268
    %v895 = vunpack.c.h.b16 %v268
    %v896 = vunpack.c.l.b16 %v269
    %v897 = vunpack.c.h.b16 %v269
    %v898 = vunpack.c.l.b16 %v270
    %v899 = vunpack.c.h.b16 %v270
    %v900 = vunpack.c.l.b16 %v271
    %v901 = vunpack.c.h.b16 %v271
    %v902 = vunpack.c.l.b16 %v272
    %v903 = vunpack.c.h.b16 %v272
    %v904 = vunpack.c.l.b16 %v273
    %v905 = vunpack.c.h.b16 %v273
    %v906 = vunpack.c.l.b16 %v274
    %v907 = vunpack.c.h.b16 %v274
    %v908 = vunpack.c.l.b16 %v275
    %v909 = vunpack.c.h.b16 %v275
    %v910 = vunpack.c.l.b16 %v276
    %v911 = vunpack.c.h.b16 %v276
    %v912 = vunpack.c.l.b16 %v277
    %v913 = vunpack.c.h.b16 %v277
    %v914 = vunpack.c.l.b16 %v278
    %v915 = vunpack.c.h.b16 %v278
    %v916 = vunpack.c.l.b16 %v279
    %v917 = vunpack.c.h.b16 %v279
    %v918 = vunpack.c.l.b16 %v280
    %v919 = vunpack.c.h.b16 %v280
    %v920 = vunpack.c.l.b16 %v281
    %v921 = vunpack.c.h.b16 %v281
    %v922 = vunpack.c.l.b16 %v282
    %v923 = vunpack.c.h.b16 %v282
    %v924 = vunpack.c.l.b16 %v283
    %v925 = vunpack.c.h.b16 %v283
    %v926 = vunpack.c.l.b16 %v284
    %v927 = vunpack.c.h.b16 %v284
    %v928 = vunpack.c.l.b16 %v285
    %v929 = vunpack.c.h.b16 %v285
    %v930 = vunpack.c.l.b16 %v286
    %v931 = vunpack.c.h.b16 %v286
    %v932 = vunpack.c.l.b16 %v287
    %v933 = vunpack.c.h.b16 %v287
    %v934 = vunpack.c.l.b16 %v288
    %v935 = vunpack.c.h.b16 %v288
    %v936 = vunpack.c.l.b16 %v289
    %v937 = vunpack.c.h.b16 %v289
    %v938 = vunpack.c.l.b16 %v290
    %v939 = vunpack.c.h.b16 %v290
    %v940 = vunpack.c.l.b16 %v291
    %v941 = vunpack.c.h.b16 %v291
    %v942 = vunpack.c.l.b16 %v292
    %v943 = vunpack.c.h.b16 %v292
    %v944 = vpack.c.b16 %v544, %v540
    %v945 = vpack.c.b16 %v545, %v541
    %v946 = vpack.c.b16 %v546, %v542
    %v947 = vpack.c.b16 %v547, %v543
    %v948 = vpack.c.b16 %v552, %v548
    %v949 = vpack.c.b16 %v553, %v549
    %v950 = vpack.c.b16 %v554, %v550
    %v951 = vpack.c.b16 %v555, %v551
    %v952 = vpack.c.b16 %v560, %v556
    %v953 = vpack.c.b16 %v561, %v557
    %v954 = vpack.c.b16 %v562, %v558
    %v955 = vpack.c.b16 %v563, %v559
    %v956 = vpack.c.b16 %v568, %v564
    %v957 = vpack.c.b16 %v569, %v565
    %v958 = vpack.c.b16 %v570, %v566
    %v959 = vpack.c.b16 %v571, %v567
    %v960 = vpack.c.b16 %v576, %v572
    %v961 = vpack.c.b16 %v577, %v573
    %v962 = vpack.c.b16 %v578, %v574
    %v963 = vpack.c.b16 %v579, %v575
    %v964 = vpack.c.b16 %v584, %v580
    %v965 = vpack.c.b16 %v585, %v581
    %v966 = vpack.c.b16 %v586, %v582
    %v967 = vpack.c.b16 %v587, %v583
    %v968 = vpack.c.b16 %v592, %v588
    %v969 = vpack.c.b16 %v593, %v589
    %v970 = vpack.c.b16 %v594, %v590
    %v971 = vpack.c.b16 %v595, %v591
    %v972 = vpack.c.b16 %v600, %v596
    %v973 = vpack.c.b16 %v601, %v597
    %v974 = vpack.c.b16 %v602, %v598
    %v975 = vpack.c.b16 %v603, %v599
    %v976 = vpack.c.b16 %v608, %v604
    %v977 = vpack.c.b16 %v609, %v605
    %v978 = vpack.c.b16 %v610, %v606
    %v979 = vpack.c.b16 %v611, %v607
    %v980 = vpack.c.b16 %v616, %v612
    %v981 = vpack.c.b16 %v617, %v613
    %v982 = vpack.c.b16 %v618, %v614
    %v983 = vpack.c.b16 %v619, %v615
    %v984 = vpack.c.b16 %v624, %v620
    %v985 = vpack.c.b16 %v625, %v621
    %v986 = vpack.c.b16 %v626, %v622
    %v987 = vpack.c.b16 %v627, %v623
    %v988 = vpack.c.b16 %v632, %v628
    %v989 = vpack.c.b16 %v633, %v629
    %v990 = vpack.c.b16 %v634, %v630
    %v991 = vpack.c.b16 %v635, %v631
    %v992 = vpack.c.b16 %v640, %v636
    %v993 = vpack.c.b16 %v641, %v637
    %v994 = vpack.c.b16 %v642, %v638
    %v995 = vpack.c.b16 %v643, %v639
    %v996 = vpack.c.b16 %v648, %v644
    %v997 = vpack.c.b16 %v649, %v645
    %v998 = vpack.c.b16 %v650, %v646
    %v999 = vpack.c.b16 %v651, %v647
    %v1000 = vpack.c.b16 %v656, %v652
    %v1001 = vpack.c.b16 %v657, %v653
    %v1002 = vpack.c.b16 %v658, %v654
    %v1003 = vpack.c.b16 %v659, %v655
    %v1004 = vpack.c.b16 %v664, %v660
    %v1005 = vpack.c.b16 %v665, %v661
    %v1006 = vpack.c.b16 %v666, %v662
    %v1007 = vpack.c.b16 %v667, %v663
    %v1008 = vpack.c.b16 %v672, %v668
    %v1009 = vpack.c.b16 %v673, %v669
    %v1010 = vpack.c.b16 %v674, %v670
    %v1011 = vpack.c.b16 %v675, %v671
    %v1012 = vpack.c.b16 %v680, %v676
    %v1013 = vpack.c.b16 %v681, %v677
    %v1014 = vpack.c.b16 %v682, %v678
    %v1015 = vpack.c.b16 %v683, %v679
    %v1016 = vpack.c.b16 %v688, %v684
    %v1017 = vpack.c.b16 %v689, %v685
    %v1018 = vpack.c.b16 %v690, %v686
    %v1019 = vpack.c.b16 %v691, %v687
    %v1020 = vpack.c.b16 %v696, %v692
    %v1021 = vpack.c.b16 %v697, %v693
    %v1022 = vpack.c.b16 %v698, %v694
    %v1023 = vpack.c.b16 %v699, %v695
    %v1024 = vpack.c.b16 %v704, %v700
    %v1025 = vpack.c.b16 %v705, %v701
    %v1026 = vpack.c.b16 %v706, %v702
    %v1027 = vpack.c.b16 %v707, %v703
    %v1028 = vpack.c.b16 %v712, %v708
    %v1029 = vpack.c.b16 %v713, %v709
    %v1030 = vpack.c.b16 %v714, %v710
    %v1031 = vpack.c.b16 %v715, %v711
    %v1032 = vpack.c.b16 %v720, %v716
    %v1033 = vpack.c.b16 %v721, %v717
    %v1034 = vpack.c.b16 %v722, %v718
    %v1035 = vpack.c.b16 %v723, %v719
    %v1036 = vpack.c.b16 %v728, %v724
    %v1037 = vpack.c.b16 %v729, %v725
    %v1038 = vpack.c.b16 %v730, %v726
    %v1039 = vpack.c.b16 %v731, %v727
    %v1040 = vpack.c.b16 %v736, %v732
    %v1041 = vpack.c.b16 %v737, %v733
    %v1042 = vpack.c.b16 %v738, %v734
    %v1043 = vpack.c.b16 %v739, %v735
    %v1044 = vpack.c.b16 %v744, %v740
    %v1045 = vpack.c.b16 %v745, %v741
    %v1046 = vpack.c.b16 %v746, %v742
    %v1047 = vpack.c.b16 %v747, %v743
    %v1048 = vpack.c.b16 %v752, %v748
    %v1049 = vpack.c.b16 %v753, %v749
    %v1050 = vpack.c.b16 %v754, %v750
    %v1051 = vpack.c.b16 %v755, %v751
    %v1052 = vpack.c.b16 %v760, %v756
    %v1053 = vpack.c.b16 %v761, %v757
    %v1054 = vpack.c.b16 %v762, %v758
    %v1055 = vpack.c.b16 %v763, %v759
    %v1056 = vpack.c.b16 %v768, %v764
    %v1057 = vpack.c.b16 %v769, %v765
    %v1058 = vpack.c.b16 %v770, %v766
    %v1059 = vpack.c.b16 %v771, %v767
    %v1060 = vpack.c.b16 %v776, %v772
    %v1061 = vpack.c.b16 %v777, %v773
    %v1062 = vpack.c.b16 %v778, %v774
    %v1063 = vpack.c.b16 %v779, %v775
    %v1064 = vpack.c.b16 %v784, %v780
    %v1065 = vpack.c.b16 %v785, %v781
    %v1066 = vpack.c.b16 %v786, %v782
    %v1067 = vpack.c.b16 %v787, %v783
    %v1068 = vpack.c.b16 %v792, %v788
    %v1069 = vpack.c.b16 %v793, %v789
    %v1070 = vpack.c.b16 %v794, %v790
    %v1071 = vpack.c.b16 %v795, %v791
    %v1072 = vpack.c.b16 %v800, %v796
    %v1073 = vpack.c.b16 %v801, %v797
    %v1074 = vpack.c.b16 %v802, %v798
    %v1075 = vpack.c.b16 %v803, %v799
    %v1076 = vpack.c.b16 %v808, %v804
    %v1077 = vpack.c.b16 %v809, %v805
    %v1078 = vpack.c.b16 %v810, %v806
    %v1079 = vpack.c.b16 %v811, %v807
    %v1080 = vpack.c.b16 %v816, %v812
    %v1081 = vpack.c.b16 %v817, %v813
    %v1082 = vpack.c.b16 %v818, %v814
    %v1083 = vpack.c.b16 %v819, %v815
    %v1084 = vpack.c.b16 %v824, %v820
    %v1085 = vpack.c.b16 %v825, %v821
    %v1086 = vpack.c.b16 %v826, %v822
    %v1087 = vpack.c.b16 %v827, %v823
    %v1088 = vpack.c.b16 %v832, %v828
    %v1089 = vpack.c.b16 %v833, %v829
    %v1090 = vpack.c.b16 %v834, %v830
    %v1091 = vpack.c.b16 %v835, %v831
    %v1092 = vpack.c.b16 %v840, %v836
    %v1093 = vpack.c.b16 %v841, %v837
    %v1094 = vpack.c.b16 %v842, %v838
    %v1095 = vpack.c.b16 %v843, %v839
    %v1096 = vpack.c.b16 %v848, %v844
    %v1097 = vpack.c.b16 %v849, %v845
    %v1098 = vpack.c.b16 %v850, %v846
    %v1099 = vpack.c.b16 %v851, %v847
    %v1100 = vpack.c.b16 %v856, %v852
    %v1101 = vpack.c.b16 %v857, %v853
    %v1102 = vpack.c.b16 %v858, %v854
    %v1103 = vpack.c.b16 %v859, %v855
    %v1104 = vpack.c.b16 %v864, %v860
    %v1105 = vpack.c.b16 %v865, %v861
    %v1106 = vpack.c.b16 %v866, %v862
    %v1107 = vpack.c.b16 %v867, %v863
    %v1108 = vpack.c.b16 %v872, %v868
    %v1109 = vpack.c.b16 %v873, %v869
    %v1110 = vpack.c.b16 %v874, %v870
    %v1111 = vpack.c.b16 %v875, %v871
    %v1112 = vpack.c.b16 %v880, %v876
    %v1113 = vpack.c.b16 %v881, %v877
    %v1114 = vpack.c.b16 %v882, %v878
    %v1115 = vpack.c.b16 %v883, %v879
    %v1116 = vpack.c.b16 %v888, %v884
    %v1117 = vpack.c.b16 %v889, %v885
    %v1118 = vpack.c.b16 %v890, %v886
    %v1119 = vpack.c.b16 %v891, %v887
    %v1120 = vpack.c.b16 %v896, %v892
    %v1121 = vpack.c.b16 %v897, %v893
    %v1122 = vpack.c.b16 %v898, %v894
    %v1123 = vpack.c.b16 %v899, %v895
    %v1124 = vpack.c.b16 %v904, %v900
    %v1125 = vpack.c.b16 %v905, %v901
    %v1126 = vpack.c.b16 %v906, %v902
    %v1127 = vpack.c.b16 %v907, %v903
    %v1128 = vpack.c.b16 %v912, %v908
    %v1129 = vpack.c.b16 %v913, %v909
    %v1130 = vpack.c.b16 %v914, %v910
    %v1131 = vpack.c.b16 %v915, %v911
    %v1132 = vpack.c.b16 %v920, %v916
    %v1133 = vpack.c.b16 %v921, %v917
    %v1134 = vpack.c.b16 %v922, %v918
    %v1135 = vpack.c.b16 %v923, %v919
    %v1136 = vpack.c.b16 %v928, %v924
    %v1137 = vpack.c.b16 %v929, %v925
    %v1138 = vpack.c.b16 %v930, %v926
    %v1139 = vpack.c.b16 %v931, %v927
    %v1140 = vpack.c.b16 %v936, %v932
    %v1141 = vpack.c.b16 %v937, %v933
    %v1142 = vpack.c.b16 %v938, %v934
    %v1143 = vpack.c.b16 %v939, %v935
    %v1144 = vpack.c.b16 %v940, %v940
    %v1145 = vpack.c.b16 %v941, %v941
    %v1146 = vpack.c.b16 %v942, %v942
    %v1147 = vpack.c.b16 %v943, %v943
    %vm1348 = vcmask 293888
    %v1350 = vsel %vm1348, %v331, 0
    %vm1352 = vcmask 1041408
    %v1354 = vsel %vm1352, %v1144, 0
    %v1357 = vsel %vm1352, %v1145, 0
    %v1360 = vsel %vm1352, %v1146, 0
    %v1363 = vsel %vm1352, %v1147, 0
    %1365 = vmatpush.bf16.msra.mxu0 %v972
    %1366 = vmatpush.bf16.msra.mxu0 %v968
    %1367 = vmatpush.bf16.msra.mxu0 %v964
    %1368 = vmatpush.bf16.msra.mxu0 %v960
    %1369 = vmatpush.bf16.msra.mxu0 %v956
    %1370 = vmatpush.bf16.msra.mxu0 %v952
    %1371 = vmatpush.bf16.msra.mxu0 %v948
    %1372 = vmatpush.bf16.msra.mxu0 %v944
    %1373 = vmatmul.bf16.gmra.mxu0 %v325
    %v1374 = vpop.f32.mrf.mxu0
    %v1375 = vadd.f32 %v295, %v1374
    %v1376 = vpop.f32.mrf.mxu0
    %v1377 = vadd.f32 %v295, %v1376
    %1378 = vdwg.mxu0
    %1379 = vmatpush.bf16.msra.mxu0 %v1004
    %1380 = vmatpush.bf16.msra.mxu0 %v1000
    %1381 = vmatpush.bf16.msra.mxu0 %v996
    %1382 = vmatpush.bf16.msra.mxu0 %v992
    %1383 = vmatpush.bf16.msra.mxu0 %v988
    %1384 = vmatpush.bf16.msra.mxu0 %v984
    %1385 = vmatpush.bf16.msra.mxu0 %v980
    %1386 = vmatpush.bf16.msra.mxu0 %v976
    %1387 = vmatmul.bf16.gmra.mxu0 %v326
    %v1388 = vpop.f32.mrf.mxu0
    %v1389 = vadd.f32 %v1375, %v1388
    %v1390 = vpop.f32.mrf.mxu0
    %v1391 = vadd.f32 %v1377, %v1390
    %1392 = vdwg.mxu0
    %1393 = vmatpush.bf16.msra.mxu0 %v1036
    %1394 = vmatpush.bf16.msra.mxu0 %v1032
    %1395 = vmatpush.bf16.msra.mxu0 %v1028
    %1396 = vmatpush.bf16.msra.mxu0 %v1024
    %1397 = vmatpush.bf16.msra.mxu0 %v1020
    %1398 = vmatpush.bf16.msra.mxu0 %v1016
    %1399 = vmatpush.bf16.msra.mxu0 %v1012
    %1400 = vmatpush.bf16.msra.mxu0 %v1008
    %1401 = vmatmul.bf16.gmra.mxu0 %v327
    %v1402 = vpop.f32.mrf.mxu0
    %v1403 = vadd.f32 %v1389, %v1402
    %v1404 = vpop.f32.mrf.mxu0
    %v1405 = vadd.f32 %v1391, %v1404
    %1406 = vdwg.mxu0
    %1407 = vmatpush.bf16.msra.mxu0 %v1068
    %1408 = vmatpush.bf16.msra.mxu0 %v1064
    %1409 = vmatpush.bf16.msra.mxu0 %v1060
    %1410 = vmatpush.bf16.msra.mxu0 %v1056
    %1411 = vmatpush.bf16.msra.mxu0 %v1052
    %1412 = vmatpush.bf16.msra.mxu0 %v1048
    %1413 = vmatpush.bf16.msra.mxu0 %v1044
    %1414 = vmatpush.bf16.msra.mxu0 %v1040
    %1415 = vmatmul.bf16.gmra.mxu0 %v328
    %v1416 = vpop.f32.mrf.mxu0
    %v1417 = vadd.f32 %v1403, %v1416
    %v1418 = vpop.f32.mrf.mxu0
    %v1419 = vadd.f32 %v1405, %v1418
    %1420 = vdwg.mxu0
    %1421 = vmatpush.bf16.msra.mxu0 %v1100
    %1422 = vmatpush.bf16.msra.mxu0 %v1096
    %1423 = vmatpush.bf16.msra.mxu0 %v1092
    %1424 = vmatpush.bf16.msra.mxu0 %v1088
    %1425 = vmatpush.bf16.msra.mxu0 %v1084
    %1426 = vmatpush.bf16.msra.mxu0 %v1080
    %1427 = vmatpush.bf16.msra.mxu0 %v1076
    %1428 = vmatpush.bf16.msra.mxu0 %v1072
    %1429 = vmatmul.bf16.gmra.mxu0 %v329
    %v1430 = vpop.f32.mrf.mxu0
    %v1431 = vadd.f32 %v1417, %v1430
    %v1432 = vpop.f32.mrf.mxu0
    %v1433 = vadd.f32 %v1419, %v1432
    %1434 = vdwg.mxu0
    %1435 = vmatpush.bf16.msra.mxu0 %v1132
    %1436 = vmatpush.bf16.msra.mxu0 %v1128
    %1437 = vmatpush.bf16.msra.mxu0 %v1124
    %1438 = vmatpush.bf16.msra.mxu0 %v1120
    %1439 = vmatpush.bf16.msra.mxu0 %v1116
    %1440 = vmatpush.bf16.msra.mxu0 %v1112
    %1441 = vmatpush.bf16.msra.mxu0 %v1108
    %1442 = vmatpush.bf16.msra.mxu0 %v1104
    %1443 = vmatmul.bf16.gmra.mxu0 %v330
    %v1444 = vpop.f32.mrf.mxu0
    %v1445 = vadd.f32 %v1431, %v1444
    %v1446 = vpop.f32.mrf.mxu0
    %v1447 = vadd.f32 %v1433, %v1446
    %1448 = vdwg.mxu0
    %1449 = vmatpush.bf16.msra.mxu0 0
    %1450 = vmatpush.bf16.msra.mxu0 0
    %1451 = vmatpush.bf16.msra.mxu0 0
    %1452 = vmatpush.bf16.msra.mxu0 0
    %1453 = vmatpush.bf16.msra.mxu0 0
    %1454 = vmatpush.bf16.msra.mxu0 %v1354
    %1455 = vmatpush.bf16.msra.mxu0 %v1140
    %1456 = vmatpush.bf16.msra.mxu0 %v1136
    %1457 = vmatmul.bf16.gmra.mxu0 %v1350
    %v1458 = vpop.f32.mrf.mxu0
    %v1459 = vadd.f32 %v1445, %v1458
    %v1460 = vpop.f32.mrf.mxu0
    %v1461 = vadd.f32 %v1447, %v1460
    %1462 = vdwg.mxu0
    %1463 = vmatpush.bf16.msra.mxu0 %v973
    %1464 = vmatpush.bf16.msra.mxu0 %v969
    %1465 = vmatpush.bf16.msra.mxu0 %v965
    %1466 = vmatpush.bf16.msra.mxu0 %v961
    %1467 = vmatpush.bf16.msra.mxu0 %v957
    %1468 = vmatpush.bf16.msra.mxu0 %v953
    %1469 = vmatpush.bf16.msra.mxu0 %v949
    %1470 = vmatpush.bf16.msra.mxu0 %v945
    %1471 = vmatmul.bf16.gmra.mxu0 %v325
    %v1472 = vpop.f32.mrf.mxu0
    %v1473 = vadd.f32 %v296, %v1472
    %v1474 = vpop.f32.mrf.mxu0
    %v1475 = vadd.f32 %v296, %v1474
    %1476 = vdwg.mxu0
    %1477 = vmatpush.bf16.msra.mxu0 %v1005
    %1478 = vmatpush.bf16.msra.mxu0 %v1001
    %1479 = vmatpush.bf16.msra.mxu0 %v997
    %1480 = vmatpush.bf16.msra.mxu0 %v993
    %1481 = vmatpush.bf16.msra.mxu0 %v989
    %1482 = vmatpush.bf16.msra.mxu0 %v985
    %1483 = vmatpush.bf16.msra.mxu0 %v981
    %1484 = vmatpush.bf16.msra.mxu0 %v977
    %1485 = vmatmul.bf16.gmra.mxu0 %v326
    %v1486 = vpop.f32.mrf.mxu0
    %v1487 = vadd.f32 %v1473, %v1486
    %v1488 = vpop.f32.mrf.mxu0
    %v1489 = vadd.f32 %v1475, %v1488
    %1490 = vdwg.mxu0
    %1491 = vmatpush.bf16.msra.mxu0 %v1037
    %1492 = vmatpush.bf16.msra.mxu0 %v1033
    %1493 = vmatpush.bf16.msra.mxu0 %v1029
    %1494 = vmatpush.bf16.msra.mxu0 %v1025
    %1495 = vmatpush.bf16.msra.mxu0 %v1021
    %1496 = vmatpush.bf16.msra.mxu0 %v1017
    %1497 = vmatpush.bf16.msra.mxu0 %v1013
    %1498 = vmatpush.bf16.msra.mxu0 %v1009
    %1499 = vmatmul.bf16.gmra.mxu0 %v327
    %v1500 = vpop.f32.mrf.mxu0
    %v1501 = vadd.f32 %v1487, %v1500
    %v1502 = vpop.f32.mrf.mxu0
    %v1503 = vadd.f32 %v1489, %v1502
    %1504 = vdwg.mxu0
    %1505 = vmatpush.bf16.msra.mxu0 %v1069
    %1506 = vmatpush.bf16.msra.mxu0 %v1065
    %1507 = vmatpush.bf16.msra.mxu0 %v1061
    %1508 = vmatpush.bf16.msra.mxu0 %v1057
    %1509 = vmatpush.bf16.msra.mxu0 %v1053
    %1510 = vmatpush.bf16.msra.mxu0 %v1049
    %1511 = vmatpush.bf16.msra.mxu0 %v1045
    %1512 = vmatpush.bf16.msra.mxu0 %v1041
    %1513 = vmatmul.bf16.gmra.mxu0 %v328
    %v1514 = vpop.f32.mrf.mxu0
    %v1515 = vadd.f32 %v1501, %v1514
    %v1516 = vpop.f32.mrf.mxu0
    %v1517 = vadd.f32 %v1503, %v1516
    %1518 = vdwg.mxu0
    %1519 = vmatpush.bf16.msra.mxu0 %v1101
    %1520 = vmatpush.bf16.msra.mxu0 %v1097
    %1521 = vmatpush.bf16.msra.mxu0 %v1093
    %1522 = vmatpush.bf16.msra.mxu0 %v1089
    %1523 = vmatpush.bf16.msra.mxu0 %v1085
    %1524 = vmatpush.bf16.msra.mxu0 %v1081
    %1525 = vmatpush.bf16.msra.mxu0 %v1077
    %1526 = vmatpush.bf16.msra.mxu0 %v1073
    %1527 = vmatmul.bf16.gmra.mxu0 %v329
    %v1528 = vpop.f32.mrf.mxu0
    %v1529 = vadd.f32 %v1515, %v1528
    %v1530 = vpop.f32.mrf.mxu0
    %v1531 = vadd.f32 %v1517, %v1530
    %1532 = vdwg.mxu0
    %1533 = vmatpush.bf16.msra.mxu0 %v1133
    %1534 = vmatpush.bf16.msra.mxu0 %v1129
    %1535 = vmatpush.bf16.msra.mxu0 %v1125
    %1536 = vmatpush.bf16.msra.mxu0 %v1121
    %1537 = vmatpush.bf16.msra.mxu0 %v1117
    %1538 = vmatpush.bf16.msra.mxu0 %v1113
    %1539 = vmatpush.bf16.msra.mxu0 %v1109
    %1540 = vmatpush.bf16.msra.mxu0 %v1105
    %1541 = vmatmul.bf16.gmra.mxu0 %v330
    %v1542 = vpop.f32.mrf.mxu0
    %v1543 = vadd.f32 %v1529, %v1542
    %v1544 = vpop.f32.mrf.mxu0
    %v1545 = vadd.f32 %v1531, %v1544
    %1546 = vdwg.mxu0
    %1547 = vmatpush.bf16.msra.mxu0 0
    %1548 = vmatpush.bf16.msra.mxu0 0
    %1549 = vmatpush.bf16.msra.mxu0 0
    %1550 = vmatpush.bf16.msra.mxu0 0
    %1551 = vmatpush.bf16.msra.mxu0 0
    %1552 = vmatpush.bf16.msra.mxu0 %v1357
    %1553 = vmatpush.bf16.msra.mxu0 %v1141
    %1554 = vmatpush.bf16.msra.mxu0 %v1137
    %1555 = vmatmul.bf16.gmra.mxu0 %v1350
    %v1556 = vpop.f32.mrf.mxu0
    %v1557 = vadd.f32 %v1543, %v1556
    %v1558 = vpop.f32.mrf.mxu0
    %v1559 = vadd.f32 %v1545, %v1558
    %1560 = vdwg.mxu0
    %1561 = vmatpush.bf16.msra.mxu0 %v974
    %1562 = vmatpush.bf16.msra.mxu0 %v970
    %1563 = vmatpush.bf16.msra.mxu0 %v966
    %1564 = vmatpush.bf16.msra.mxu0 %v962
    %1565 = vmatpush.bf16.msra.mxu0 %v958
    %1566 = vmatpush.bf16.msra.mxu0 %v954
    %1567 = vmatpush.bf16.msra.mxu0 %v950
    %1568 = vmatpush.bf16.msra.mxu0 %v946
    %1569 = vmatmul.bf16.gmra.mxu0 %v325
    %v1570 = vpop.f32.mrf.mxu0
    %v1571 = vadd.f32 %v297, %v1570
    %v1572 = vpop.f32.mrf.mxu0
    %v1573 = vadd.f32 %v297, %v1572
    %1574 = vdwg.mxu0
    %1575 = vmatpush.bf16.msra.mxu0 %v1006
    %1576 = vmatpush.bf16.msra.mxu0 %v1002
    %1577 = vmatpush.bf16.msra.mxu0 %v998
    %1578 = vmatpush.bf16.msra.mxu0 %v994
    %1579 = vmatpush.bf16.msra.mxu0 %v990
    %1580 = vmatpush.bf16.msra.mxu0 %v986
    %1581 = vmatpush.bf16.msra.mxu0 %v982
    %1582 = vmatpush.bf16.msra.mxu0 %v978
    %1583 = vmatmul.bf16.gmra.mxu0 %v326
    %v1584 = vpop.f32.mrf.mxu0
    %v1585 = vadd.f32 %v1571, %v1584
    %v1586 = vpop.f32.mrf.mxu0
    %v1587 = vadd.f32 %v1573, %v1586
    %1588 = vdwg.mxu0
    %1589 = vmatpush.bf16.msra.mxu0 %v1038
    %1590 = vmatpush.bf16.msra.mxu0 %v1034
    %1591 = vmatpush.bf16.msra.mxu0 %v1030
    %1592 = vmatpush.bf16.msra.mxu0 %v1026
    %1593 = vmatpush.bf16.msra.mxu0 %v1022
    %1594 = vmatpush.bf16.msra.mxu0 %v1018
    %1595 = vmatpush.bf16.msra.mxu0 %v1014
    %1596 = vmatpush.bf16.msra.mxu0 %v1010
    %1597 = vmatmul.bf16.gmra.mxu0 %v327
    %v1598 = vpop.f32.mrf.mxu0
    %v1599 = vadd.f32 %v1585, %v1598
    %v1600 = vpop.f32.mrf.mxu0
    %v1601 = vadd.f32 %v1587, %v1600
    %1602 = vdwg.mxu0
    %1603 = vmatpush.bf16.msra.mxu0 %v1070
    %1604 = vmatpush.bf16.msra.mxu0 %v1066
    %1605 = vmatpush.bf16.msra.mxu0 %v1062
    %1606 = vmatpush.bf16.msra.mxu0 %v1058
    %1607 = vmatpush.bf16.msra.mxu0 %v1054
    %1608 = vmatpush.bf16.msra.mxu0 %v1050
    %1609 = vmatpush.bf16.msra.mxu0 %v1046
    %1610 = vmatpush.bf16.msra.mxu0 %v1042
    %1611 = vmatmul.bf16.gmra.mxu0 %v328
    %v1612 = vpop.f32.mrf.mxu0
    %v1613 = vadd.f32 %v1599, %v1612
    %v1614 = vpop.f32.mrf.mxu0
    %v1615 = vadd.f32 %v1601, %v1614
    %1616 = vdwg.mxu0
    %1617 = vmatpush.bf16.msra.mxu0 %v1102
    %1618 = vmatpush.bf16.msra.mxu0 %v1098
    %1619 = vmatpush.bf16.msra.mxu0 %v1094
    %1620 = vmatpush.bf16.msra.mxu0 %v1090
    %1621 = vmatpush.bf16.msra.mxu0 %v1086
    %1622 = vmatpush.bf16.msra.mxu0 %v1082
    %1623 = vmatpush.bf16.msra.mxu0 %v1078
    %1624 = vmatpush.bf16.msra.mxu0 %v1074
    %1625 = vmatmul.bf16.gmra.mxu0 %v329
    %v1626 = vpop.f32.mrf.mxu0
    %v1627 = vadd.f32 %v1613, %v1626
    %v1628 = vpop.f32.mrf.mxu0
    %v1629 = vadd.f32 %v1615, %v1628
    %1630 = vdwg.mxu0
    %1631 = vmatpush.bf16.msra.mxu0 %v1134
    %1632 = vmatpush.bf16.msra.mxu0 %v1130
    %1633 = vmatpush.bf16.msra.mxu0 %v1126
    %1634 = vmatpush.bf16.msra.mxu0 %v1122
    %1635 = vmatpush.bf16.msra.mxu0 %v1118
    %1636 = vmatpush.bf16.msra.mxu0 %v1114
    %1637 = vmatpush.bf16.msra.mxu0 %v1110
    %1638 = vmatpush.bf16.msra.mxu0 %v1106
    %1639 = vmatmul.bf16.gmra.mxu0 %v330
    %v1640 = vpop.f32.mrf.mxu0
    %v1641 = vadd.f32 %v1627, %v1640
    %v1642 = vpop.f32.mrf.mxu0
    %v1643 = vadd.f32 %v1629, %v1642
    %1644 = vdwg.mxu0
    %1645 = vmatpush.bf16.msra.mxu0 0
    %1646 = vmatpush.bf16.msra.mxu0 0
    %1647 = vmatpush.bf16.msra.mxu0 0
    %1648 = vmatpush.bf16.msra.mxu0 0
    %1649 = vmatpush.bf16.msra.mxu0 0
    %1650 = vmatpush.bf16.msra.mxu0 %v1360
    %1651 = vmatpush.bf16.msra.mxu0 %v1142
    %1652 = vmatpush.bf16.msra.mxu0 %v1138
    %1653 = vmatmul.bf16.gmra.mxu0 %v1350
    %v1654 = vpop.f32.mrf.mxu0
    %v1655 = vadd.f32 %v1641, %v1654
    %v1656 = vpop.f32.mrf.mxu0
    %v1657 = vadd.f32 %v1643, %v1656
    %1658 = vdwg.mxu0
    %1659 = vmatpush.bf16.msra.mxu0 %v975
    %1660 = vmatpush.bf16.msra.mxu0 %v971
    %1661 = vmatpush.bf16.msra.mxu0 %v967
    %1662 = vmatpush.bf16.msra.mxu0 %v963
    %1663 = vmatpush.bf16.msra.mxu0 %v959
    %1664 = vmatpush.bf16.msra.mxu0 %v955
    %1665 = vmatpush.bf16.msra.mxu0 %v951
    %1666 = vmatpush.bf16.msra.mxu0 %v947
    %1667 = vmatmul.bf16.gmra.mxu0 %v325
    %v1668 = vpop.f32.mrf.mxu0
    %v1669 = vadd.f32 %v298, %v1668
    %v1670 = vpop.f32.mrf.mxu0
    %v1671 = vadd.f32 %v298, %v1670
    %1672 = vdwg.mxu0
    %1673 = vmatpush.bf16.msra.mxu0 %v1007
    %1674 = vmatpush.bf16.msra.mxu0 %v1003
    %1675 = vmatpush.bf16.msra.mxu0 %v999
    %1676 = vmatpush.bf16.msra.mxu0 %v995
    %1677 = vmatpush.bf16.msra.mxu0 %v991
    %1678 = vmatpush.bf16.msra.mxu0 %v987
    %1679 = vmatpush.bf16.msra.mxu0 %v983
    %1680 = vmatpush.bf16.msra.mxu0 %v979
    %1681 = vmatmul.bf16.gmra.mxu0 %v326
    %v1682 = vpop.f32.mrf.mxu0
    %v1683 = vadd.f32 %v1669, %v1682
    %v1684 = vpop.f32.mrf.mxu0
    %v1685 = vadd.f32 %v1671, %v1684
    %1686 = vdwg.mxu0
    %1687 = vmatpush.bf16.msra.mxu0 %v1039
    %1688 = vmatpush.bf16.msra.mxu0 %v1035
    %1689 = vmatpush.bf16.msra.mxu0 %v1031
    %1690 = vmatpush.bf16.msra.mxu0 %v1027
    %1691 = vmatpush.bf16.msra.mxu0 %v1023
    %1692 = vmatpush.bf16.msra.mxu0 %v1019
    %1693 = vmatpush.bf16.msra.mxu0 %v1015
    %1694 = vmatpush.bf16.msra.mxu0 %v1011
    %1695 = vmatmul.bf16.gmra.mxu0 %v327
    %v1696 = vpop.f32.mrf.mxu0
    %v1697 = vadd.f32 %v1683, %v1696
    %v1698 = vpop.f32.mrf.mxu0
    %v1699 = vadd.f32 %v1685, %v1698
    %1700 = vdwg.mxu0
    %1701 = vmatpush.bf16.msra.mxu0 %v1071
    %1702 = vmatpush.bf16.msra.mxu0 %v1067
    %1703 = vmatpush.bf16.msra.mxu0 %v1063
    %1704 = vmatpush.bf16.msra.mxu0 %v1059
    %1705 = vmatpush.bf16.msra.mxu0 %v1055
    %1706 = vmatpush.bf16.msra.mxu0 %v1051
    %1707 = vmatpush.bf16.msra.mxu0 %v1047
    %1708 = vmatpush.bf16.msra.mxu0 %v1043
    %1709 = vmatmul.bf16.gmra.mxu0 %v328
    %v1710 = vpop.f32.mrf.mxu0
    %v1711 = vadd.f32 %v1697, %v1710
    %v1712 = vpop.f32.mrf.mxu0
    %v1713 = vadd.f32 %v1699, %v1712
    %1714 = vdwg.mxu0
    %1715 = vmatpush.bf16.msra.mxu0 %v1103
    %1716 = vmatpush.bf16.msra.mxu0 %v1099
    %1717 = vmatpush.bf16.msra.mxu0 %v1095
    %1718 = vmatpush.bf16.msra.mxu0 %v1091
    %1719 = vmatpush.bf16.msra.mxu0 %v1087
    %1720 = vmatpush.bf16.msra.mxu0 %v1083
    %1721 = vmatpush.bf16.msra.mxu0 %v1079
    %1722 = vmatpush.bf16.msra.mxu0 %v1075
    %1723 = vmatmul.bf16.gmra.mxu0 %v329
    %v1724 = vpop.f32.mrf.mxu0
    %v1725 = vadd.f32 %v1711, %v1724
    %v1726 = vpop.f32.mrf.mxu0
    %v1727 = vadd.f32 %v1713, %v1726
    %1728 = vdwg.mxu0
    %1729 = vmatpush.bf16.msra.mxu0 %v1135
    %1730 = vmatpush.bf16.msra.mxu0 %v1131
    %1731 = vmatpush.bf16.msra.mxu0 %v1127
    %1732 = vmatpush.bf16.msra.mxu0 %v1123
    %1733 = vmatpush.bf16.msra.mxu0 %v1119
    %1734 = vmatpush.bf16.msra.mxu0 %v1115
    %1735 = vmatpush.bf16.msra.mxu0 %v1111
    %1736 = vmatpush.bf16.msra.mxu0 %v1107
    %1737 = vmatmul.bf16.gmra.mxu0 %v330
    %v1738 = vpop.f32.mrf.mxu0
    %v1739 = vadd.f32 %v1725, %v1738
    %v1740 = vpop.f32.mrf.mxu0
    %v1741 = vadd.f32 %v1727, %v1740
    %1742 = vdwg.mxu0
    %1743 = vmatpush.bf16.msra.mxu0 0
    %1744 = vmatpush.bf16.msra.mxu0 0
    %1745 = vmatpush.bf16.msra.mxu0 0
    %1746 = vmatpush.bf16.msra.mxu0 0
    %1747 = vmatpush.bf16.msra.mxu0 0
    %1748 = vmatpush.bf16.msra.mxu0 %v1363
    %1749 = vmatpush.bf16.msra.mxu0 %v1143
    %1750 = vmatpush.bf16.msra.mxu0 %v1139
    %1751 = vmatmul.bf16.gmra.mxu0 %v1350
    %v1752 = vpop.f32.mrf.mxu0
    %v1753 = vadd.f32 %v1739, %v1752
    %v1754 = vpop.f32.mrf.mxu0
    %v1755 = vadd.f32 %v1741, %v1754
    %1756 = vdwg.mxu0
    %v1757 = vtanh.pop %v1459
    %v1758 = vtanh.pop %v1557
    %v1759 = vtanh.pop %v1655
    %v1760 = vtanh.pop %v1753
    %v1761 = vtanh.pop %v1461
    %v1762 = vtanh.pop %v1559
    %v1763 = vtanh.pop %v1657
    %v1764 = vtanh.pop %v1755
    %v1765 = vpack.c.bf16 %v1761, %v1757
    %v1766 = vpack.c.bf16 %v1762, %v1758
    %v1767 = vpack.c.bf16 %v1763, %v1759
    %v1768 = vpack.c.bf16 %v1764, %v1760
    %v1769 = vld [vmem:[#allocation8] sm:$0xf]
    %v1770 = vld [vmem:[#allocation8 + $0x4] sm:$0xf]
    %v1771 = vld [vmem:[#allocation8 + $0x8] sm:$0xf]
    %v1772 = vld [vmem:[#allocation8 + $0xc] sm:$0xf]
    %v1773 = vld [vmem:[#allocation8 + $0x10] sm:$0xf]
    %v1774 = vld [vmem:[#allocation8 + $0x14] sm:$0xf]
    %v1775 = vld [vmem:[#allocation8 + $0x18] sm:$0xf]
    %v1776 = vld [vmem:[#allocation8 + $0x1c] sm:$0xf]
    %v1777 = vld [vmem:[#allocation8 + $0x20] sm:$0xf]
    %v1778 = vld [vmem:[#allocation8 + $0x24] sm:$0xf]
    %v1779 = vld [vmem:[#allocation8 + $0x28] sm:$0xf]
    %v1780 = vld [vmem:[#allocation8 + $0x2c] sm:$0xf]
    %v1781 = vld [vmem:[#allocation8 + $0x30] sm:$0xf]
    %v1782 = vld [vmem:[#allocation8 + $0x34] sm:$0xf]
    %v1783 = vld [vmem:[#allocation8 + $0x38] sm:$0xf]
    %v1784 = vld [vmem:[#allocation8 + $0x3c] sm:$0xf]
    %v1785 = vld [vmem:[#allocation8 + $0x40] sm:$0xf]
    %v1786 = vld [vmem:[#allocation8 + $0x44] sm:$0xf]
    %v1787 = vld [vmem:[#allocation8 + $0x48] sm:$0xf]
    %v1788 = vld [vmem:[#allocation8 + $0x4c] sm:$0xf]
    %v1789 = vld [vmem:[#allocation8 + $0x50] sm:$0xf]
    %v1790 = vld [vmem:[#allocation8 + $0x54] sm:$0xf]
    %v1791 = vld [vmem:[#allocation8 + $0x58] sm:$0xf]
    %v1792 = vld [vmem:[#allocation8 + $0x5c] sm:$0xf]
    %v1793 = vld [vmem:[#allocation8 + $0x60] sm:$0xf]
    %v1794 = vld [vmem:[#allocation8 + $0x64] sm:$0xf]
    %v1795 = vld [vmem:[#allocation8 + $0x68] sm:$0xf]
    %v1796 = vld [vmem:[#allocation8 + $0x6c] sm:$0xf]
    %v1797 = vld [vmem:[#allocation8 + $0x70] sm:$0xf]
    %v1798 = vld [vmem:[#allocation8 + $0x74] sm:$0xf]
    %v1799 = vld [vmem:[#allocation8 + $0x78] sm:$0xf]
    %v1800 = vld [vmem:[#allocation8 + $0x7c] sm:$0xf]
    %v1801 = vld [vmem:[#allocation8 + $0x80] sm:$0xf]
    %v1802 = vld [vmem:[#allocation8 + $0x84] sm:$0xf]
    %v1803 = vld [vmem:[#allocation8 + $0x88] sm:$0xf]
    %v1804 = vld [vmem:[#allocation8 + $0x8c] sm:$0xf]
    %v1805 = vld [vmem:[#allocation8 + $0x90] sm:$0xf]
    %v1806 = vld [vmem:[#allocation8 + $0x94] sm:$0xf]
    %v1807 = vld [vmem:[#allocation8 + $0x98] sm:$0xf]
    %v1808 = vld [vmem:[#allocation8 + $0x9c] sm:$0xf]
    %v1809 = vld [vmem:[#allocation8 + $0xa0] sm:$0xf]
    %v1810 = vld [vmem:[#allocation8 + $0xa4] sm:$0xf]
    %v1811 = vld [vmem:[#allocation8 + $0xa8] sm:$0xf]
    %v1812 = vld [vmem:[#allocation8 + $0xac] sm:$0xf]
    %v1813 = vld [vmem:[#allocation8 + $0xb0] sm:$0xf]
    %v1814 = vld [vmem:[#allocation8 + $0xb4] sm:$0xf]
    %v1815 = vld [vmem:[#allocation8 + $0xb8] sm:$0xf]
    %v1816 = vld [vmem:[#allocation8 + $0xbc] sm:$0xf]
    %v1817 = vld [vmem:[#allocation8 + $0xc0] sm:$0xf]
    %v1818 = vld [vmem:[#allocation8 + $0xc4] sm:$0xf]
    %v1819 = vld [vmem:[#allocation8 + $0xc8] sm:$0xf]
    %v1820 = vld [vmem:[#allocation8 + $0xcc] sm:$0xf]
    %v1821 = vld [vmem:[#allocation8 + $0xd0] sm:$0xf]
    %v1822 = vld [vmem:[#allocation8 + $0xd4] sm:$0xf]
    %v1823 = vld [vmem:[#allocation8 + $0xd8] sm:$0xf]
    %v1824 = vld [vmem:[#allocation8 + $0xdc] sm:$0xf]
    %v1825 = vld [vmem:[#allocation8 + $0xe0] sm:$0xf]
    %v1826 = vld [vmem:[#allocation8 + $0xe4] sm:$0xf]
    %v1827 = vld [vmem:[#allocation8 + $0xe8] sm:$0xf]
    %v1828 = vld [vmem:[#allocation8 + $0xec] sm:$0xf]
    %v1829 = vld [vmem:[#allocation8 + $0xf0] sm:$0xf]
    %v1830 = vld [vmem:[#allocation8 + $0xf4] sm:$0xf]
    %v1831 = vld [vmem:[#allocation8 + $0xf8] sm:$0xf]
    %v1832 = vld [vmem:[#allocation8 + $0xfc] sm:$0xf]
    %v1833 = vld [vmem:[%s4] sm:$0x1]
    %v1835 = vperm.slane %v1833, 0
    %v1901 = vunpack.c.l.b16 %v1769
    %v1902 = vunpack.c.l.b16 %v1770
    %v1903 = vunpack.c.l.b16 %v1771
    %v1904 = vunpack.c.l.b16 %v1772
    %v1905 = vunpack.c.l.b16 %v1773
    %v1906 = vunpack.c.l.b16 %v1774
    %v1907 = vunpack.c.l.b16 %v1775
    %v1908 = vunpack.c.l.b16 %v1776
    %v1909 = vunpack.c.l.b16 %v1777
    %v1910 = vunpack.c.l.b16 %v1778
    %v1911 = vunpack.c.l.b16 %v1779
    %v1912 = vunpack.c.l.b16 %v1780
    %v1913 = vunpack.c.l.b16 %v1781
    %v1914 = vunpack.c.l.b16 %v1782
    %v1915 = vunpack.c.l.b16 %v1783
    %v1916 = vunpack.c.l.b16 %v1784
    %v1917 = vunpack.c.l.b16 %v1785
    %v1918 = vunpack.c.l.b16 %v1786
    %v1919 = vunpack.c.l.b16 %v1787
    %v1920 = vunpack.c.l.b16 %v1788
    %v1921 = vunpack.c.l.b16 %v1789
    %v1922 = vunpack.c.l.b16 %v1790
    %v1923 = vunpack.c.l.b16 %v1791
    %v1924 = vunpack.c.l.b16 %v1792
    %v1925 = vunpack.c.l.b16 %v1793
    %v1926 = vunpack.c.l.b16 %v1794
    %v1927 = vunpack.c.l.b16 %v1795
    %v1928 = vunpack.c.l.b16 %v1796
    %v1929 = vunpack.c.l.b16 %v1797
    %v1930 = vunpack.c.l.b16 %v1798
    %v1931 = vunpack.c.l.b16 %v1799
    %v1932 = vunpack.c.l.b16 %v1800
    %v1933 = vunpack.c.l.b16 %v1801
    %v1934 = vunpack.c.l.b16 %v1802
    %v1935 = vunpack.c.l.b16 %v1803
    %v1936 = vunpack.c.l.b16 %v1804
    %v1937 = vunpack.c.l.b16 %v1805
    %v1938 = vunpack.c.l.b16 %v1806
    %v1939 = vunpack.c.l.b16 %v1807
    %v1940 = vunpack.c.l.b16 %v1808
    %v1941 = vunpack.c.l.b16 %v1809
    %v1942 = vunpack.c.l.b16 %v1810
    %v1943 = vunpack.c.l.b16 %v1811
    %v1944 = vunpack.c.l.b16 %v1812
    %v1945 = vunpack.c.l.b16 %v1813
    %v1946 = vunpack.c.l.b16 %v1814
    %v1947 = vunpack.c.l.b16 %v1815
    %v1948 = vunpack.c.l.b16 %v1816
    %v1949 = vunpack.c.l.b16 %v1817
    %v1950 = vunpack.c.l.b16 %v1818
    %v1951 = vunpack.c.l.b16 %v1819
    %v1952 = vunpack.c.l.b16 %v1820
    %v1953 = vunpack.c.l.b16 %v1821
    %v1954 = vunpack.c.l.b16 %v1822
    %v1955 = vunpack.c.l.b16 %v1823
    %v1956 = vunpack.c.l.b16 %v1824
    %v1957 = vunpack.c.l.b16 %v1825
    %v1958 = vunpack.c.l.b16 %v1826
    %v1959 = vunpack.c.l.b16 %v1827
    %v1960 = vunpack.c.l.b16 %v1828
    %v1961 = vunpack.c.l.b16 %v1829
    %v1962 = vunpack.c.l.b16 %v1830
    %v1963 = vunpack.c.l.b16 %v1831
    %v1964 = vunpack.c.l.b16 %v1832
    %v1965 = vpack.c.b16 %v1902, %v1901
    %v1966 = vpack.c.b16 %v1904, %v1903
    %v1967 = vpack.c.b16 %v1906, %v1905
    %v1968 = vpack.c.b16 %v1908, %v1907
    %v1969 = vpack.c.b16 %v1910, %v1909
    %v1970 = vpack.c.b16 %v1912, %v1911
    %v1971 = vpack.c.b16 %v1914, %v1913
    %v1972 = vpack.c.b16 %v1916, %v1915
    %v1973 = vpack.c.b16 %v1918, %v1917
    %v1974 = vpack.c.b16 %v1920, %v1919
    %v1975 = vpack.c.b16 %v1922, %v1921
    %v1976 = vpack.c.b16 %v1924, %v1923
    %v1977 = vpack.c.b16 %v1926, %v1925
    %v1978 = vpack.c.b16 %v1928, %v1927
    %v1979 = vpack.c.b16 %v1930, %v1929
    %v1980 = vpack.c.b16 %v1932, %v1931
    %v1981 = vpack.c.b16 %v1934, %v1933
    %v1982 = vpack.c.b16 %v1936, %v1935
    %v1983 = vpack.c.b16 %v1938, %v1937
    %v1984 = vpack.c.b16 %v1940, %v1939
    %v1985 = vpack.c.b16 %v1942, %v1941
    %v1986 = vpack.c.b16 %v1944, %v1943
    %v1987 = vpack.c.b16 %v1946, %v1945
    %v1988 = vpack.c.b16 %v1948, %v1947
    %v1989 = vpack.c.b16 %v1950, %v1949
    %v1990 = vpack.c.b16 %v1952, %v1951
    %v1991 = vpack.c.b16 %v1954, %v1953
    %v1992 = vpack.c.b16 %v1956, %v1955
    %v1993 = vpack.c.b16 %v1958, %v1957
    %v1994 = vpack.c.b16 %v1960, %v1959
    %v1995 = vpack.c.b16 %v1962, %v1961
    %v1996 = vpack.c.b16 %v1964, %v1963
    %2029 = vmatpush.bf16.msra.mxu0 %v1972
    %2030 = vmatpush.bf16.msra.mxu0 %v1971
    %2031 = vmatpush.bf16.msra.mxu0 %v1970
    %2032 = vmatpush.bf16.msra.mxu0 %v1969
    %2033 = vmatpush.bf16.msra.mxu0 %v1968
    %2034 = vmatpush.bf16.msra.mxu0 %v1967
    %2035 = vmatpush.bf16.msra.mxu0 %v1966
    %2036 = vmatpush.bf16.msra.mxu0 %v1965
    %2037 = vmatmul.bf16.gmra.mxu0 %v1765
    %v2038 = vpop.f32.mrf.mxu0
    %v2039 = vadd.f32 %v1835, %v2038
    %v2040 = vpop.f32.mrf.mxu0
    %v2041 = vadd.f32 %v1835, %v2040
    %2042 = vdwg.mxu0
    %2043 = vmatpush.bf16.msra.mxu0 %v1980
    %2044 = vmatpush.bf16.msra.mxu0 %v1979
    %2045 = vmatpush.bf16.msra.mxu0 %v1978
    %2046 = vmatpush.bf16.msra.mxu0 %v1977
    %2047 = vmatpush.bf16.msra.mxu0 %v1976
    %2048 = vmatpush.bf16.msra.mxu0 %v1975
    %2049 = vmatpush.bf16.msra.mxu0 %v1974
    %2050 = vmatpush.bf16.msra.mxu0 %v1973
    %2051 = vmatmul.bf16.gmra.mxu0 %v1766
    %v2052 = vpop.f32.mrf.mxu0
    %v2053 = vadd.f32 %v2039, %v2052
    %v2054 = vpop.f32.mrf.mxu0
    %v2055 = vadd.f32 %v2041, %v2054
    %2056 = vdwg.mxu0
    %2057 = vmatpush.bf16.msra.mxu0 %v1988
    %2058 = vmatpush.bf16.msra.mxu0 %v1987
    %2059 = vmatpush.bf16.msra.mxu0 %v1986
    %2060 = vmatpush.bf16.msra.mxu0 %v1985
    %2061 = vmatpush.bf16.msra.mxu0 %v1984
    %2062 = vmatpush.bf16.msra.mxu0 %v1983
    %2063 = vmatpush.bf16.msra.mxu0 %v1982
    %2064 = vmatpush.bf16.msra.mxu0 %v1981
    %2065 = vmatmul.bf16.gmra.mxu0 %v1767
    %v2066 = vpop.f32.mrf.mxu0
    %v2067 = vadd.f32 %v2053, %v2066
    %v2068 = vpop.f32.mrf.mxu0
    %v2069 = vadd.f32 %v2055, %v2068
    %2070 = vdwg.mxu0
    %2071 = vmatpush.bf16.msra.mxu0 %v1996
    %2072 = vmatpush.bf16.msra.mxu0 %v1995
    %2073 = vmatpush.bf16.msra.mxu0 %v1994
    %2074 = vmatpush.bf16.msra.mxu0 %v1993
    %2075 = vmatpush.bf16.msra.mxu0 %v1992
    %2076 = vmatpush.bf16.msra.mxu0 %v1991
    %2077 = vmatpush.bf16.msra.mxu0 %v1990
    %2078 = vmatpush.bf16.msra.mxu0 %v1989
    %2079 = vmatmul.bf16.gmra.mxu0 %v1768
    %v2080 = vpop.f32.mrf.mxu0
    %v2081 = vadd.f32 %v2067, %v2080
    %v2082 = vpop.f32.mrf.mxu0
    %v2083 = vadd.f32 %v2069, %v2082
    %2084 = vdwg.mxu0
    %2085 = vst [vmem:[#allocation10] sm:$0xff] %v2081
    %2086 = vst [vmem:[#allocation10 + $0x8] sm:$0xff] %v2083
    // Predicated region
    $region38: #{antibiotic_predictor_forward.1} parent=1 // pred_check
      _
    $region39: #{antibiotic_predictor_forward.1} parent=1 // pred_check_branch
      %2088 = sbr.rel (0) target = $region41
    $region40: #{antibiotic_predictor_forward.1} parent=1 // pred_region
      %2090 = vsyncadd [#allocation4], 128
      %s2091 = sshll.u32 [#allocation10], 4
      %s2092 = int_to_ptr.vmem [resolvable:$true] %s2091
      %s2093 = sshll.u32 %s5, 4
      %s2094 = int_to_ptr.hbm [resolvable:$true] %s2093
      %2099 = dma.vmem_to_hbm [thread:$0]  %s2092, 128, %s2094, [#allocation4], 128, 128, 8
    $region41: #{antibiotic_predictor_forward.1} parent=1 // pred_fallthru
      _
    // Predicated region
    $region42: #{antibiotic_predictor_forward.1} parent=1 // pred_check
      _
    $region43: #{antibiotic_predictor_forward.1} parent=1 // pred_check_branch
      %2101 = sbr.rel (0) target = $region45
    $region44: #{antibiotic_predictor_forward.1} parent=1 // pred_region
      %2103 = dma.done [#allocation4], 256
    $region45: #{antibiotic_predictor_forward.1} parent=1 // pred_fallthru
      _
    %2104 = vsyncpa [#allocation3], 1
    %2105 = vsyncpa [#allocation6], 1
    %2106 = vsyncpa [#allocation9], 1
    %2107 = vsyncpa [#allocation4], 1

</llo_original>
